<compile_context>
chip_gen: v7x
topology: tpu7x:2x2x1
jax: 0.10.0
libtpu: 0.0.40
codegen_flags: <defaults>
</compile_context>

<pallas_src>
import jax
import jax.numpy as jnp
from jax.experimental import pallas as pl
from jax.experimental.pallas import tpu as pltpu


_VMEM_LIMIT = 32 * 1024 * 1024  # explicit, safe on v5e/v6e/v7x for these tiles


def _pick_tile(L):
    """Largest lane tile in {512,256,128} dividing L with >=2 tiles, else L."""
    for d in (512, 256, 128):
        if L % d == 0 and L // d >= 2:
            return d
    return L


# ---------------------------------------------------------------------------
# Kernel A: fused branch conv.  Per (batch, L-tile):
#   state = W_state_comb @ feats + b_state
#   proj  = W_proj_comb  @ feats + b_proj
# where feats = [im2col5(x) ; maxpool(x)]  (K = 26*C) and the combined weights
# already contain the concat-fusion scalars and the 1x1/3x3 branches folded
# into the 5x5 taps.  bf16 inputs, f32 accumulation, bf16 outputs.
# ---------------------------------------------------------------------------
def branch_conv(feats_bf16, w_state, b_state, w_proj, b_proj, tl):
    n, K, L = feats_bf16.shape
    num_s = w_state.shape[0]
    num_n = w_proj.shape[0]
    nlt = L // tl

    def kernel(f_ref, ws_ref, bs_ref, wp_ref, bp_ref, st_ref, pj_ref):
        f = f_ref[0]                                            # (K, tl) bf16
        st = jnp.dot(ws_ref[...], f,
                     preferred_element_type=jnp.float32) + bs_ref[...]
        pj = jnp.dot(wp_ref[...], f,
                     preferred_element_type=jnp.float32) + bp_ref[...]
        st_ref[0] = st.astype(st_ref.dtype)
        pj_ref[0] = pj.astype(pj_ref.dtype)

    return pl.pallas_call(
        kernel,
        out_shape=(jax.ShapeDtypeStruct((n, num_s, L), jnp.bfloat16),
                   jax.ShapeDtypeStruct((n, num_n, L), jnp.bfloat16)),
        grid=(n, nlt),
        in_specs=[
            pl.BlockSpec((1, K, tl), lambda b, l: (b, 0, l)),
            pl.BlockSpec((num_s, K), lambda b, l: (0, 0)),
            pl.BlockSpec((num_s, 1), lambda b, l: (0, 0)),
            pl.BlockSpec((num_n, K), lambda b, l: (0, 0)),
            pl.BlockSpec((num_n, 1), lambda b, l: (0, 0)),
        ],
        out_specs=(pl.BlockSpec((1, num_s, tl), lambda b, l: (b, 0, l)),
                   pl.BlockSpec((1, num_n, tl), lambda b, l: (b, 0, l))),
        compiler_params=pltpu.CompilerParams(
            dimension_semantics=("parallel", "parallel"),
            vmem_limit_bytes=_VMEM_LIMIT),
    )(feats_bf16, w_state, b_state, w_proj, b_proj)


# ---------------------------------------------------------------------------
# Kernel B: fused GloRe core + conv_extend + BN + residual.
#   lt == 0 :  xns = state @ proj^T ; GCN ; rel ; W' = bn_scale*(Wext@rel)
#              (W' cached in VMEM scratch, one tiny matmul chain per batch)
#   every lt:  out_tile = x_tile + W' @ proj_tile + bn_shift
# ---------------------------------------------------------------------------
def glore_core_fused(xf, state, proj, wext, scale_col, shift_col, w1, b1, w2, tl):
    n, C, L = xf.shape
    num_s = state.shape[1]
    num_n = proj.shape[1]
    nlt = L // tl

    def kernel(st_ref, pjf_ref, pjt_ref, x_ref, wext_ref, sc_ref, sh_ref,
               w1_ref, b1_ref, w2_ref, o_ref, wp_ref):
        lt = pl.program_id(1)

        @pl.when(lt == 0)
        def _():
            st = st_ref[0]                                       # (num_s, L) bf16
            pj = pjf_ref[0]                                      # (num_n, L) bf16
            # x_n_state = state @ proj^T  (contract over L)
            xns = jax.lax.dot_general(st, pj, (((1,), (1,)), ((), ())),
                                      preferred_element_type=jnp.float32)
            # GCN conv1 over node dim: h[s, j] = sum_i W1[j, i] * xns[s, i] + b1[j]
            h = jax.lax.dot_general(xns, w1_ref[...], (((1,), (1,)), ((), ())),
                                    preferred_element_type=jnp.float32) + b1_ref[...]
            h = jnp.maximum(h + xns, 0.0)
            # GCN conv2 over state dim (no bias)
            rel = jnp.dot(w2_ref[...], h, preferred_element_type=jnp.float32)
            # fold conv_extend + BN scale:  W' = scale * (Wext @ rel)   (C, num_n)
            wpm = jnp.dot(wext_ref[...], rel, preferred_element_type=jnp.float32)
            wp_ref[...] = wpm * sc_ref[...]

        # residual epilogue for this L tile
        ext = jnp.dot(wp_ref[...].astype(jnp.bfloat16), pjt_ref[0],
                      preferred_element_type=jnp.float32)        # (C, tl)
        o_ref[0] = x_ref[0] + ext + sh_ref[...]

    return pl.pallas_call(
        kernel,
        out_shape=jax.ShapeDtypeStruct((n, C, L), jnp.float32),
        grid=(n, nlt),
        in_specs=[
            pl.BlockSpec((1, num_s, L), lambda b, l: (b, 0, 0)),   # state (full L)
            pl.BlockSpec((1, num_n, L), lambda b, l: (b, 0, 0)),   # proj  (full L)
            pl.BlockSpec((1, num_n, tl), lambda b, l: (b, 0, l)),  # proj  (L tile)
            pl.BlockSpec((1, C, tl), lambda b, l: (b, 0, l)),      # x     (L tile)
            pl.BlockSpec((C, num_s), lambda b, l: (0, 0)),
            pl.BlockSpec((C, 1), lambda b, l: (0, 0)),
            pl.BlockSpec((C, 1), lambda b, l: (0, 0)),
            pl.BlockSpec((num_n, num_n), lambda b, l: (0, 0)),
            pl.BlockSpec((1, num_n), lambda b, l: (0, 0)),
            pl.BlockSpec((num_s, num_s), lambda b, l: (0, 0)),
        ],
        out_specs=pl.BlockSpec((1, C, tl), lambda b, l: (b, 0, l)),
        scratch_shapes=[pltpu.VMEM((C, num_n), jnp.float32)],
        compiler_params=pltpu.CompilerParams(
            dimension_semantics=("parallel", "arbitrary"),
            vmem_limit_bytes=_VMEM_LIMIT),
    )(state, proj, proj, xf, wext, scale_col, shift_col, w1, b1, w2)


# ---------------------------------------------------------------------------
# Plain-JAX glue: im2col patch extraction and the 3x3 stride-1 max pool.
# ---------------------------------------------------------------------------
def _im2col(x, k):
    n, C, H, W = x.shape
    p = k // 2
    xp = jnp.pad(x, ((0, 0), (0, 0), (p, p), (p, p)))
    cols = []
    for dy in range(k):
        for dx in range(k):
            cols.append(xp[:, :, dy:dy + H, dx:dx + W])
    patches = jnp.stack(cols, axis=2)          # (n, C, k*k, H, W)
    return patches.reshape(n, C * k * k, H * W)


def _maxpool3x3_same(x):
    n, C, H, W = x.shape
    xp = jnp.pad(x, ((0, 0), (0, 0), (1, 1), (1, 1)), constant_values=-jnp.inf)
    m = xp[:, :, 0:H, 0:W]
    for dy in range(3):
        for dx in range(3):
            if dy == 0 and dx == 0:
                continue
            m = jnp.maximum(m, xp[:, :, dy:dy + H, dx:dx + W])
    return m


# ---------------------------------------------------------------------------
# Full forward pass (mirrors GloRe_Unit_v2.forward)
# ---------------------------------------------------------------------------
def glore_unit_v2_forward(x, p, num_s, num_n, eps=1e-4):
    n, C, H, W = x.shape
    L = H * W
    tl = _pick_tile(L)

    # plain-JAX data movement: -inf max-pool + one shared 5x5 im2col
    mp = _maxpool3x3_same(x).reshape(n, C, L)
    feats = jnp.concatenate([_im2col(x, 5), mp], axis=1)      # (n, 26*C, L)
    feats = feats.astype(jnp.bfloat16)

    # fold concat-fusion scalars + 1x1/3x3 branches into a single 26*C weight
    def fold(w1, b1, w3, b3, w5, b5, wm, bm, wc, bc):
        cout = w5.shape[0]
        a = wc.reshape(4)
        w5c = (a[2] * w5
               + a[1] * jnp.pad(w3, ((0, 0), (0, 0), (1, 1), (1, 1)))
               + a[0] * jnp.pad(w1, ((0, 0), (0, 0), (2, 2), (2, 2))))
        wmc = a[3] * wm.reshape(cout, C)
        wall = jnp.concatenate([w5c.reshape(cout, C * 25), wmc], axis=1)
        ball = a[0] * b1 + a[1] * b3 + a[2] * b5 + a[3] * bm + bc.reshape(())
        return wall.astype(jnp.bfloat16), ball[:, None]

    ws_all, bs_all = fold(p['w1s'], p['b1s'], p['w3s'], p['b3s'], p['w5s'],
                          p['b5s'], p['wms'], p['bms'], p['wcs'], p['bcs'])
    wp_all, bp_all = fold(p['w1p'], p['b1p'], p['w3p'], p['b3p'], p['w5p'],
                          p['b5p'], p['wmp'], p['bmp'], p['wcp'], p['bcp'])

    state, proj = branch_conv(feats, ws_all, bs_all, wp_all, bp_all, tl)

    # inference-mode BatchNorm folded into scale/shift
    scale = p['bn_gamma'] / jnp.sqrt(p['bn_var'] + eps)
    shift = p['bn_beta'] - p['bn_mean'] * scale

    out = glore_core_fused(x.reshape(n, C, L), state, proj,
                           p['wext'].reshape(C, num_s),
                           scale[:, None], shift[:, None],
                           p['gcn_w1'].reshape(num_n, num_n),
                           p['gcn_b1'].reshape(1, num_n),
                           p['gcn_w2'].reshape(num_s, num_s), tl)
    return out.reshape(n, C, H, W)


# ---------------------------------------------------------------------------
# Pure-JAX reference (for sanity check only)
# ---------------------------------------------------------------------------
def reference_forward(x, p, num_s, num_n, eps=1e-4):
    n, C, H, W = x.shape
    L = H * W

    def conv(xx, w, b, pad):
        y = jax.lax.conv_general_dilated(
            xx, w, (1, 1), [(pad, pad), (pad, pad)],
            dimension_numbers=('NCHW', 'OIHW', 'NCHW'))
        return y if b is None else y + b[None, :, None, None]

    mp = jax.lax.reduce_window(x, -jnp.inf, jax.lax.max,
                               (1, 1, 3, 3), (1, 1, 1, 1),
                               [(0, 0), (0, 0), (1, 1), (1, 1)])

    def branch(cout, w1, b1, w3, b3, w5, b5, wm, bm, wc, bc):
        y1 = conv(x, w1, b1, 0).reshape(n, 1, cout, L)
        y3 = conv(x, w3, b3, 1).reshape(n, 1, cout, L)
        y5 = conv(x, w5, b5, 2).reshape(n, 1, cout, L)
        ym = conv(mp, wm, bm, 0).reshape(n, 1, cout, L)
        cat = jnp.concatenate([y1, y3, y5, ym], axis=1)
        return conv(cat, wc, bc, 0).reshape(n, cout, L)

    st = branch(num_s, p['w1s'], p['b1s'], p['w3s'], p['b3s'], p['w5s'],
                p['b5s'], p['wms'], p['bms'], p['wcs'], p['bcs'])
    pr = branch(num_n, p['w1p'], p['b1p'], p['w3p'], p['b3p'], p['w5p'],
                p['b5p'], p['wmp'], p['bmp'], p['wcp'], p['bcp'])

    xns = jnp.einsum('bsl,bnl->bsn', st, pr)
    w1 = p['gcn_w1'].reshape(num_n, num_n)
    h = jnp.einsum('bsi,ji->bsj', xns, w1) + p['gcn_b1'][None, None, :]
    h = jnp.maximum(h + xns, 0.0)
    rel = jnp.einsum('ts,bsn->btn', p['gcn_w2'].reshape(num_s, num_s), h)
    y = jnp.einsum('bsn,bnl->bsl', rel, pr)
    ext = jnp.einsum('cs,bsl->bcl', p['wext'].reshape(C, num_s), y)
    scale = p['bn_gamma'] / jnp.sqrt(p['bn_var'] + eps)
    shift = p['bn_beta'] - p['bn_mean'] * scale
    reasoned = ext * scale[None, :, None] + shift[None, :, None]
    return (x.reshape(n, C, L) + reasoned).reshape(n, C, H, W)


# ---------------------------------------------------------------------------
# Deterministic parameter init (shapes follow GloRe_Unit_v2.__init__)
# ---------------------------------------------------------------------------
def init_params(key, num_in, num_mid):
    num_s, num_n = 2 * num_mid, num_mid
    C = num_in
    ks = jax.random.split(key, 24)
    r = lambda k, shp: (0.1 * jax.random.normal(k, shp)).astype(jnp.float32)
    return dict(
        w1s=r(ks[0], (num_s, C, 1, 1)), b1s=r(ks[1], (num_s,)),
        w3s=r(ks[2], (num_s, C, 3, 3)), b3s=r(ks[3], (num_s,)),
        w5s=r(ks[4], (num_s, C, 5, 5)), b5s=r(ks[5], (num_s,)),
        wms=r(ks[6], (num_s, C, 1, 1)), bms=r(ks[7], (num_s,)),
        wcs=r(ks[8], (1, 4, 1, 1)),     bcs=r(ks[9], (1,)),
        w1p=r(ks[10], (num_n, C, 1, 1)), b1p=r(ks[11], (num_n,)),
        w3p=r(ks[12], (num_n, C, 3, 3)), b3p=r(ks[13], (num_n,)),
        w5p=r(ks[14], (num_n, C, 5, 5)), b5p=r(ks[15], (num_n,)),
        wmp=r(ks[16], (num_n, C, 1, 1)), bmp=r(ks[17], (num_n,)),
        wcp=r(ks[18], (1, 4, 1, 1)),     bcp=r(ks[19], (1,)),
        gcn_w1=r(ks[20], (num_n, num_n, 1)), gcn_b1=r(ks[21], (num_n,)),
        gcn_w2=r(ks[22], (num_s, num_s, 1)),
        wext=r(ks[23], (C, num_s, 1, 1)),
        bn_gamma=jnp.ones((C,), jnp.float32),
        bn_beta=jnp.zeros((C,), jnp.float32),
        bn_mean=jnp.zeros((C,), jnp.float32),
        bn_var=jnp.ones((C,), jnp.float32),
    )


if __name__ == "__main__":
    key = jax.random.PRNGKey(0)
    kx, kp = jax.random.split(key)

    n, C, H, W = 2, 4, 16, 16
    num_mid = 4
    num_s, num_n = 2 * num_mid, num_mid

    params = init_params(kp, C, num_mid)
    x = jax.random.normal(kx, (n, C, H, W), dtype=jnp.float32)

    fwd = jax.jit(glore_unit_v2_forward, static_argnums=(2, 3))
    out = jax.block_until_ready(fwd(x, params, num_s, num_n))
    assert out.shape == (n, C, H, W)
    assert out.dtype == jnp.float32

    ref = jax.block_until_ready(reference_forward(x, params, num_s, num_n))
    max_err = float(jnp.max(jnp.abs(out - ref)))
    assert bool(jnp.allclose(out, ref, atol=2e-2, rtol=2e-2)), (
        f"mismatch vs reference (max abs err {max_err})")

    print("KERNEL_OK")
</pallas_src>

<mosaic_0001>
module attributes {stable_mosaic.version = 11 : i64} {
  func.func @kernel(%arg0: i32, %arg1: i32, %arg2: memref<1x104x128xbf16, #tpu.memory_space<vmem>>, %arg3: memref<8x104xbf16, #tpu.memory_space<vmem>>, %arg4: memref<8x1xf32, #tpu.memory_space<vmem>>, %arg5: memref<4x104xbf16, #tpu.memory_space<vmem>>, %arg6: memref<4x1xf32, #tpu.memory_space<vmem>>, %arg7: memref<1x8x128xbf16, #tpu.memory_space<vmem>>, %arg8: memref<1x4x128xbf16, #tpu.memory_space<vmem>>) attributes {dimension_semantics = [#tpu.dimension_semantics<parallel>, #tpu.dimension_semantics<parallel>], iteration_bounds = array<i64: 2, 2>, scalar_prefetch = 0 : i64, scratch_operands = 0 : i64, tpu.core_type = #tpu.core_type<tc>, window_params = [{transform_indices = @transform_0, window_bounds = array<i64: 1, 104, 128>}, {pipeline_mode = #tpu.pipeline_mode<synchronous>, transform_indices = @transform_1, window_bounds = array<i64: 8, 104>}, {pipeline_mode = #tpu.pipeline_mode<synchronous>, transform_indices = @transform_2, window_bounds = array<i64: 8, 1>}, {pipeline_mode = #tpu.pipeline_mode<synchronous>, transform_indices = @transform_3, window_bounds = array<i64: 4, 104>}, {pipeline_mode = #tpu.pipeline_mode<synchronous>, transform_indices = @transform_4, window_bounds = array<i64: 4, 1>}, {transform_indices = @transform_5, window_bounds = array<i64: 1, 8, 128>}, {transform_indices = @transform_6, window_bounds = array<i64: 1, 4, 128>}]} {
    %c0 = arith.constant 0 : index
    %c0_0 = arith.constant 0 : index
    %c0_1 = arith.constant 0 : index
    %0 = vector.load %arg2[%c0, %c0_0, %c0_1] : memref<1x104x128xbf16, #tpu.memory_space<vmem>>, vector<1x104x128xbf16>
    %1 = vector.shape_cast %0 : vector<1x104x128xbf16> to vector<104x128xbf16>
    %c0_2 = arith.constant 0 : index
    %c0_3 = arith.constant 0 : index
    %2 = vector.load %arg3[%c0_2, %c0_3] : memref<8x104xbf16, #tpu.memory_space<vmem>>, vector<8x104xbf16>
    %cst = arith.constant dense<0.000000e+00> : vector<8x128xf32>
    %3 = tpu.matmul %2, %1, %cst {dimension_numbers = #tpu.dot_dimension_numbers<[1], [0], [0], [1], [0, 0, 1, 1], [], []>} : vector<8x104xbf16>, vector<104x128xbf16>, vector<8x128xf32> -> vector<8x128xf32>
    %c0_4 = arith.constant 0 : index
    %c0_5 = arith.constant 0 : index
    %4 = vector.load %arg4[%c0_4, %c0_5] : memref<8x1xf32, #tpu.memory_space<vmem>>, vector<8x1xf32>
    %5 = vector.broadcast %4 : vector<8x1xf32> to vector<8x128xf32>
    %6 = arith.addf %3, %5 : vector<8x128xf32>
    %c0_6 = arith.constant 0 : index
    %c0_7 = arith.constant 0 : index
    %7 = vector.load %arg5[%c0_6, %c0_7] : memref<4x104xbf16, #tpu.memory_space<vmem>>, vector<4x104xbf16>
    %cst_8 = arith.constant dense<0.000000e+00> : vector<4x128xf32>
    %8 = tpu.matmul %7, %1, %cst_8 {dimension_numbers = #tpu.dot_dimension_numbers<[1], [0], [0], [1], [0, 0, 1, 1], [], []>} : vector<4x104xbf16>, vector<104x128xbf16>, vector<4x128xf32> -> vector<4x128xf32>
    %c0_9 = arith.constant 0 : index
    %c0_10 = arith.constant 0 : index
    %9 = vector.load %arg6[%c0_9, %c0_10] : memref<4x1xf32, #tpu.memory_space<vmem>>, vector<4x1xf32>
    %10 = vector.broadcast %9 : vector<4x1xf32> to vector<4x128xf32>
    %11 = arith.addf %8, %10 : vector<4x128xf32>
    %12 = arith.truncf %6 : vector<8x128xf32> to vector<8x128xbf16>
    %c0_11 = arith.constant 0 : index
    %c0_12 = arith.constant 0 : index
    %c0_13 = arith.constant 0 : index
    %13 = vector.load %arg7[%c0_11, %c0_12, %c0_13] : memref<1x8x128xbf16, #tpu.memory_space<vmem>>, vector<1x8x128xbf16>
    %14 = vector.shape_cast %13 : vector<1x8x128xbf16> to vector<8x128xbf16>
    %15 = vector.shape_cast %12 : vector<8x128xbf16> to vector<1x8x128xbf16>
    tpu.vector_store %arg7[%c0_11, %c0_12, %c0_13], %15 {strides = array<i32>} : memref<1x8x128xbf16, #tpu.memory_space<vmem>>, vector<1x8x128xbf16>,
    %16 = arith.truncf %11 : vector<4x128xf32> to vector<4x128xbf16>
    %c0_14 = arith.constant 0 : index
    %c0_15 = arith.constant 0 : index
    %c0_16 = arith.constant 0 : index
    %17 = vector.load %arg8[%c0_14, %c0_15, %c0_16] : memref<1x4x128xbf16, #tpu.memory_space<vmem>>, vector<1x4x128xbf16>
    %18 = vector.shape_cast %17 : vector<1x4x128xbf16> to vector<4x128xbf16>
    %19 = vector.shape_cast %16 : vector<4x128xbf16> to vector<1x4x128xbf16>
    tpu.vector_store %arg8[%c0_14, %c0_15, %c0_16], %19 {strides = array<i32>} : memref<1x4x128xbf16, #tpu.memory_space<vmem>>, vector<1x4x128xbf16>,
    return
  }
  func.func @transform_0(%arg0: i32, %arg1: i32) -> (i32, i32, i32) {
    %c0_i32 = arith.constant 0 : i32
    %c0_i32_0 = arith.constant 0 : i32
    return %arg0, %c0_i32, %arg1 : i32, i32, i32
  }
  func.func @transform_1(%arg0: i32, %arg1: i32) -> (i32, i32) {
    %c0_i32 = arith.constant 0 : i32
    %c0_i32_0 = arith.constant 0 : i32
    %c0_i32_1 = arith.constant 0 : i32
    return %c0_i32, %c0_i32_0 : i32, i32
  }
  func.func @transform_2(%arg0: i32, %arg1: i32) -> (i32, i32) {
    %c0_i32 = arith.constant 0 : i32
    %c0_i32_0 = arith.constant 0 : i32
    %c0_i32_1 = arith.constant 0 : i32
    return %c0_i32, %c0_i32_0 : i32, i32
  }
  func.func @transform_3(%arg0: i32, %arg1: i32) -> (i32, i32) {
    %c0_i32 = arith.constant 0 : i32
    %c0_i32_0 = arith.constant 0 : i32
    %c0_i32_1 = arith.constant 0 : i32
    return %c0_i32, %c0_i32_0 : i32, i32
  }
  func.func @transform_4(%arg0: i32, %arg1: i32) -> (i32, i32) {
    %c0_i32 = arith.constant 0 : i32
    %c0_i32_0 = arith.constant 0 : i32
    %c0_i32_1 = arith.constant 0 : i32
    return %c0_i32, %c0_i32_0 : i32, i32
  }
  func.func @transform_5(%arg0: i32, %arg1: i32) -> (i32, i32, i32) {
    %c0_i32 = arith.constant 0 : i32
    %c0_i32_0 = arith.constant 0 : i32
    return %arg0, %c0_i32, %arg1 : i32, i32, i32
  }
  func.func @transform_6(%arg0: i32, %arg1: i32) -> (i32, i32, i32) {
    %c0_i32 = arith.constant 0 : i32
    %c0_i32_0 = arith.constant 0 : i32
    return %arg0, %c0_i32, %arg1 : i32, i32, i32
  }
}

module attributes {stable_mosaic.version = 11 : i64} {
  func.func @kernel(%arg0: i32, %arg1: i32, %arg2: memref<1x8x256xbf16, #tpu.memory_space<vmem>>, %arg3: memref<1x4x256xbf16, #tpu.memory_space<vmem>>, %arg4: memref<1x4x128xbf16, #tpu.memory_space<vmem>>, %arg5: memref<1x4x128xf32, #tpu.memory_space<vmem>>, %arg6: memref<4x8xf32, #tpu.memory_space<vmem>>, %arg7: memref<4x1xf32, #tpu.memory_space<vmem>>, %arg8: memref<4x1xf32, #tpu.memory_space<vmem>>, %arg9: memref<4x4xf32, #tpu.memory_space<vmem>>, %arg10: memref<1x4xf32, #tpu.memory_space<vmem>>, %arg11: memref<8x8xf32, #tpu.memory_space<vmem>>, %arg12: memref<1x4x128xf32, #tpu.memory_space<vmem>>, %arg13: memref<4x4xf32, #tpu.memory_space<vmem>>) attributes {dimension_semantics = [#tpu.dimension_semantics<parallel>, #tpu.dimension_semantics<arbitrary>], iteration_bounds = array<i64: 2, 2>, scalar_prefetch = 0 : i64, scratch_operands = 1 : i64, tpu.core_type = #tpu.core_type<tc>, window_params = [{transform_indices = @transform_0, window_bounds = array<i64: 1, 8, 256>}, {transform_indices = @transform_1, window_bounds = array<i64: 1, 4, 256>}, {transform_indices = @transform_2, window_bounds = array<i64: 1, 4, 128>}, {transform_indices = @transform_3, window_bounds = array<i64: 1, 4, 128>}, {pipeline_mode = #tpu.pipeline_mode<synchronous>, transform_indices = @transform_4, window_bounds = array<i64: 4, 8>}, {pipeline_mode = #tpu.pipeline_mode<synchronous>, transform_indices = @transform_5, window_bounds = array<i64: 4, 1>}, {pipeline_mode = #tpu.pipeline_mode<synchronous>, transform_indices = @transform_6, window_bounds = array<i64: 4, 1>}, {pipeline_mode = #tpu.pipeline_mode<synchronous>, transform_indices = @transform_7, window_bounds = array<i64: 4, 4>}, {pipeline_mode = #tpu.pipeline_mode<synchronous>, transform_indices = @transform_8, window_bounds = array<i64: 1, 4>}, {pipeline_mode = #tpu.pipeline_mode<synchronous>, transform_indices = @transform_9, window_bounds = array<i64: 8, 8>}, {transform_indices = @transform_10, window_bounds = array<i64: 1, 4, 128>}]} {
    %c0_i32 = arith.constant 0 : i32
    %0 = arith.cmpi eq, %arg1, %c0_i32 : i32
    %1 = arith.extui %0 : i1 to i32
    %c0_i32_0 = arith.constant 0 : i32
    %2 = arith.cmpi ne, %1, %c0_i32_0 : i32
    scf.if %2 {
      %c0_13 = arith.constant 0 : index
      %c0_14 = arith.constant 0 : index
      %c0_15 = arith.constant 0 : index
      %17 = vector.load %arg2[%c0_13, %c0_14, %c0_15] : memref<1x8x256xbf16, #tpu.memory_space<vmem>>, vector<1x8x256xbf16>
      %18 = vector.shape_cast %17 : vector<1x8x256xbf16> to vector<8x256xbf16>
      %c0_16 = arith.constant 0 : index
      %c0_17 = arith.constant 0 : index
      %c0_18 = arith.constant 0 : index
      %19 = vector.load %arg3[%c0_16, %c0_17, %c0_18] : memref<1x4x256xbf16, #tpu.memory_space<vmem>>, vector<1x4x256xbf16>
      %20 = vector.shape_cast %19 : vector<1x4x256xbf16> to vector<4x256xbf16>
      %cst_19 = arith.constant dense<0.000000e+00> : vector<8x4xf32>
      %21 = tpu.matmul %18, %20, %cst_19 {dimension_numbers = #tpu.dot_dimension_numbers<[1], [1], [0], [0], [0, 0, 1, 0], [], []>} : vector<8x256xbf16>, vector<4x256xbf16>, vector<8x4xf32> -> vector<8x4xf32>
      %c0_20 = arith.constant 0 : index
      %c0_21 = arith.constant 0 : index
      %22 = vector.load %arg9[%c0_20, %c0_21] : memref<4x4xf32, #tpu.memory_space<vmem>>, vector<4x4xf32>
      %cst_22 = arith.constant dense<0.000000e+00> : vector<8x4xf32>
      %23 = tpu.matmul %21, %22, %cst_22 {dimension_numbers = #tpu.dot_dimension_numbers<[1], [1], [0], [0], [0, 0, 1, 0], [], []>} : vector<8x4xf32>, vector<4x4xf32>, vector<8x4xf32> -> vector<8x4xf32>
      %c0_23 = arith.constant 0 : index
      %c0_24 = arith.constant 0 : index
      %24 = vector.load %arg10[%c0_23, %c0_24] : memref<1x4xf32, #tpu.memory_space<vmem>>, vector<1x4xf32>
      %25 = vector.broadcast %24 : vector<1x4xf32> to vector<8x4xf32>
      %26 = arith.addf %23, %25 : vector<8x4xf32>
      %27 = arith.addf %26, %21 : vector<8x4xf32>
      %cst_25 = arith.constant 0.000000e+00 : f32
      %28 = vector.broadcast %cst_25 : f32 to vector<8x4xf32>
      %29 = arith.maximumf %27, %28 : vector<8x4xf32>
      %c0_26 = arith.constant 0 : index
      %c0_27 = arith.constant 0 : index
      %30 = vector.load %arg11[%c0_26, %c0_27] : memref<8x8xf32, #tpu.memory_space<vmem>>, vector<8x8xf32>
      %cst_28 = arith.constant dense<0.000000e+00> : vector<8x4xf32>
      %31 = tpu.matmul %30, %29, %cst_28 {dimension_numbers = #tpu.dot_dimension_numbers<[1], [0], [0], [1], [0, 0, 1, 1], [], []>} : vector<8x8xf32>, vector<8x4xf32>, vector<8x4xf32> -> vector<8x4xf32>
      %c0_29 = arith.constant 0 : index
      %c0_30 = arith.constant 0 : index
      %32 = vector.load %arg6[%c0_29, %c0_30] : memref<4x8xf32, #tpu.memory_space<vmem>>, vector<4x8xf32>
      %cst_31 = arith.constant dense<0.000000e+00> : vector<4x4xf32>
      %33 = tpu.matmul %32, %31, %cst_31 {dimension_numbers = #tpu.dot_dimension_numbers<[1], [0], [0], [1], [0, 0, 1, 1], [], []>} : vector<4x8xf32>, vector<8x4xf32>, vector<4x4xf32> -> vector<4x4xf32>
      %c0_32 = arith.constant 0 : index
      %c0_33 = arith.constant 0 : index
      %34 = vector.load %arg7[%c0_32, %c0_33] : memref<4x1xf32, #tpu.memory_space<vmem>>, vector<4x1xf32>
      %35 = vector.broadcast %34 : vector<4x1xf32> to vector<4x4xf32>
      %36 = arith.mulf %33, %35 : vector<4x4xf32>
      %c0_34 = arith.constant 0 : index
      %c0_35 = arith.constant 0 : index
      %37 = vector.load %arg13[%c0_34, %c0_35] : memref<4x4xf32, #tpu.memory_space<vmem>>, vector<4x4xf32>
      tpu.vector_store %arg13[%c0_34, %c0_35], %36 {strides = array<i32>} : memref<4x4xf32, #tpu.memory_space<vmem>>, vector<4x4xf32>,
    } else {
    }
    %c0 = arith.constant 0 : index
    %c0_1 = arith.constant 0 : index
    %3 = vector.load %arg13[%c0, %c0_1] : memref<4x4xf32, #tpu.memory_space<vmem>>, vector<4x4xf32>
    %4 = arith.truncf %3 : vector<4x4xf32> to vector<4x4xbf16>
    %c0_2 = arith.constant 0 : index
    %c0_3 = arith.constant 0 : index
    %c0_4 = arith.constant 0 : index
    %5 = vector.load %arg4[%c0_2, %c0_3, %c0_4] : memref<1x4x128xbf16, #tpu.memory_space<vmem>>, vector<1x4x128xbf16>
    %6 = vector.shape_cast %5 : vector<1x4x128xbf16> to vector<4x128xbf16>
    %cst = arith.constant dense<0.000000e+00> : vector<4x128xf32>
    %7 = tpu.matmul %4, %6, %cst {dimension_numbers = #tpu.dot_dimension_numbers<[1], [0], [0], [1], [0, 0, 1, 1], [], []>} : vector<4x4xbf16>, vector<4x128xbf16>, vector<4x128xf32> -> vector<4x128xf32>
    %c0_5 = arith.constant 0 : index
    %c0_6 = arith.constant 0 : index
    %c0_7 = arith.constant 0 : index
    %8 = vector.load %arg5[%c0_5, %c0_6, %c0_7] : memref<1x4x128xf32, #tpu.memory_space<vmem>>, vector<1x4x128xf32>
    %9 = vector.shape_cast %8 : vector<1x4x128xf32> to vector<4x128xf32>
    %10 = arith.addf %9, %7 : vector<4x128xf32>
    %c0_8 = arith.constant 0 : index
    %c0_9 = arith.constant 0 : index
    %11 = vector.load %arg8[%c0_8, %c0_9] : memref<4x1xf32, #tpu.memory_space<vmem>>, vector<4x1xf32>
    %12 = vector.broadcast %11 : vector<4x1xf32> to vector<4x128xf32>
    %13 = arith.addf %10, %12 : vector<4x128xf32>
    %c0_10 = arith.constant 0 : index
    %c0_11 = arith.constant 0 : index
    %c0_12 = arith.constant 0 : index
    %14 = vector.load %arg12[%c0_10, %c0_11, %c0_12] : memref<1x4x128xf32, #tpu.memory_space<vmem>>, vector<1x4x128xf32>
    %15 = vector.shape_cast %14 : vector<1x4x128xf32> to vector<4x128xf32>
    %16 = vector.shape_cast %13 : vector<4x128xf32> to vector<1x4x128xf32>
    tpu.vector_store %arg12[%c0_10, %c0_11, %c0_12], %16 {strides = array<i32>} : memref<1x4x128xf32, #tpu.memory_space<vmem>>, vector<1x4x128xf32>,
    return
  }
  func.func @transform_0(%arg0: i32, %arg1: i32) -> (i32, i32, i32) {
    %c0_i32 = arith.constant 0 : i32
    %c0_i32_0 = arith.constant 0 : i32
    %c0_i32_1 = arith.constant 0 : i32
    return %arg0, %c0_i32, %c0_i32_0 : i32, i32, i32
  }
  func.func @transform_1(%arg0: i32, %arg1: i32) -> (i32, i32, i32) {
    %c0_i32 = arith.constant 0 : i32
    %c0_i32_0 = arith.constant 0 : i32
    %c0_i32_1 = arith.constant 0 : i32
    return %arg0, %c0_i32, %c0_i32_0 : i32, i32, i32
  }
  func.func @transform_2(%arg0: i32, %arg1: i32) -> (i32, i32, i32) {
    %c0_i32 = arith.constant 0 : i32
    %c0_i32_0 = arith.constant 0 : i32
    return %arg0, %c0_i32, %arg1 : i32, i32, i32
  }
  func.func @transform_3(%arg0: i32, %arg1: i32) -> (i32, i32, i32) {
    %c0_i32 = arith.constant 0 : i32
    %c0_i32_0 = arith.constant 0 : i32
    return %arg0, %c0_i32, %arg1 : i32, i32, i32
  }
  func.func @transform_4(%arg0: i32, %arg1: i32) -> (i32, i32) {
    %c0_i32 = arith.constant 0 : i32
    %c0_i32_0 = arith.constant 0 : i32
    %c0_i32_1 = arith.constant 0 : i32
    return %c0_i32, %c0_i32_0 : i32, i32
  }
  func.func @transform_5(%arg0: i32, %arg1: i32) -> (i32, i32) {
    %c0_i32 = arith.constant 0 : i32
    %c0_i32_0 = arith.constant 0 : i32
    %c0_i32_1 = arith.constant 0 : i32
    return %c0_i32, %c0_i32_0 : i32, i32
  }
  func.func @transform_6(%arg0: i32, %arg1: i32) -> (i32, i32) {
    %c0_i32 = arith.constant 0 : i32
    %c0_i32_0 = arith.constant 0 : i32
    %c0_i32_1 = arith.constant 0 : i32
    return %c0_i32, %c0_i32_0 : i32, i32
  }
  func.func @transform_7(%arg0: i32, %arg1: i32) -> (i32, i32) {
    %c0_i32 = arith.constant 0 : i32
    %c0_i32_0 = arith.constant 0 : i32
    %c0_i32_1 = arith.constant 0 : i32
    return %c0_i32, %c0_i32_0 : i32, i32
  }
  func.func @transform_8(%arg0: i32, %arg1: i32) -> (i32, i32) {
    %c0_i32 = arith.constant 0 : i32
    %c0_i32_0 = arith.constant 0 : i32
    %c0_i32_1 = arith.constant 0 : i32
    return %c0_i32, %c0_i32_0 : i32, i32
  }
  func.func @transform_9(%arg0: i32, %arg1: i32) -> (i32, i32) {
    %c0_i32 = arith.constant 0 : i32
    %c0_i32_0 = arith.constant 0 : i32
    %c0_i32_1 = arith.constant 0 : i32
    return %c0_i32, %c0_i32_0 : i32, i32
  }
  func.func @transform_10(%arg0: i32, %arg1: i32) -> (i32, i32, i32) {
    %c0_i32 = arith.constant 0 : i32
    %c0_i32_0 = arith.constant 0 : i32
    return %arg0, %c0_i32, %arg1 : i32, i32, i32
  }
}

</mosaic_0001>

<llo_original>
// kernel: glore_unit_v2_forward.2
$region0: #{glore_unit_v2_forward.2}
  #allocation0 [shape = 'u32[]', space=smem, size = 0x4, offset = 0x4, fixed_abs, tag = 'smem constant byte address 0x4 - core index']
  #allocation1 [shape = 'u32[144,128]{1,0:T(1,128)}', space=vmem, size = 0x12000, scoped, tag = 'internal scratch']
  %s0 = inlined_call_operand.vmem [shape: bf16[2,104,256], index: 0, kind: input, shape index: {}]
  %s1 = inlined_call_operand.vmem [shape: bf16[8,104], index: 1, kind: input, shape index: {}]
  %s2 = inlined_call_operand.vmem [shape: f32[8,1], index: 2, kind: input, shape index: {}]
  %s3 = inlined_call_operand.vmem [shape: bf16[4,104], index: 3, kind: input, shape index: {}]
  %s4 = inlined_call_operand.vmem [shape: f32[4,1], index: 4, kind: input, shape index: {}]
  %s5 = inlined_call_operand.vmem [shape: bf16[2,8,256], index: 5, kind: output, shape index: {0}]
  %s6 = inlined_call_operand.vmem [shape: bf16[2,4,256], index: 6, kind: output, shape index: {1}]
  %7 = xla_tuple %s5, %s6
  %s8 = sld [smem:[#allocation0]]
  $region102: #{glore_unit_v2_forward.2} parent=0
    _
  %s10 = ssub.s32 1, %s8
  %s11 = scalar_select 0, %s10, %s8
  $region1: #{glore_unit_v2_forward.2} parent=0
    #allocation2 [shape = 'u8[53248]{0}', space=vmem, size = 0xd000, scoped, tag = 'input window, operand 0']
    loop: start=0, step=1, limit=6
    $region2: #{glore_unit_v2_forward.2} parent=1 // loop_pre_header
      _
    $region3: #{glore_unit_v2_forward.2} parent=1 // loop_header
      %s13 = sphi 0, %s17
      %p14 = scmp.ge.s32.totalorder %s13, 6
      %s20 = sphi 0, %s32
      %s21 = sphi 0, %s28
      %s22 = sphi 0, %s20
      %s23 = sphi 0, %s21
      %s24 = sphi 0, %s22
      %s25 = sphi 0, %s23
      %s37 = sphi 0, %s39
      %s40 = sphi 0, %s37
      %s41 = sphi 0, %s40
      %s57 = sphi 0, %s41
      %s61 = sphi 0, %s61
      %s63 = sphi 0, %s61
      %s64 = sphi 0, %s63
      %s78 = sphi 0, %s64
      %s82 = sphi 0, %s82
      %s84 = sphi 0, %s82
      %s85 = sphi 0, %s84
      %s99 = sphi 0, %s85
      %s103 = sphi 0, %s103
      %s105 = sphi 0, %s103
      %s106 = sphi 0, %s105
      %s120 = sphi 0, %s106
      %s124 = sphi 0, %s124
      %s126 = sphi 0, %s124
      %s127 = sphi 0, %s126
      %s141 = sphi 0, %s127
      %s149 = sphi 0, %s151
      %s152 = sphi 0, %s149
      %s153 = sphi 0, %s152
      %s169 = sphi 0, %s153
      %s177 = sphi 0, %s179
      %s180 = sphi 0, %s177
      %s181 = sphi 0, %s180
      %s197 = sphi 0, %s181
    $region4: #{glore_unit_v2_forward.2} parent=1 // loop_header_branch
      %16 = sbr.rel (%p14) target = $region8
    $region5: #{glore_unit_v2_forward.2} parent=1 // loop_body
      %s18 = ssub.s32 %s13, 1
      %s19 = ssub.s32 %s13, 2
      %s26 = sadd.s32 1, %s21
      %p27 = scmp.ge.s32.totalorder %s26, 2
      %s28 = scalar_select %p27, 0, %s26
      %s29 = sadd.s32 1, %s20
      %s30 = scalar_select %p27, %s29, %s20
      %p31 = scmp.ge.s32.totalorder %s30, 2
      %s32 = scalar_select %p31, 0, %s30
      %s33 = ssub.s32 %s20, %s32
      %s34 = ssub.s32 %s21, %s28
      %s35 = sor.u32 %s33, %s34
      %p36 = scmp.eq.s32.totalorder %s35, 0
      %s38 = sadd.s32 %s37, 1
      %s39 = scalar_select %p36, %s37, %s38
      %p42 = pneg %p36
      %p43 = scmp.eq.s32.totalorder %s13, 3
      %p44 = por %p42, %p43
      %p45 = scmp.ne.s32.totalorder %s37, %s40
      %p46 = scmp.eq.s32.totalorder %s13, 0
      %p47 = por %p45, %p46
      %p48 = scmp.ne.s32.totalorder %s37, %s40
      %p49 = scmp.eq.s32.totalorder %s18, 3
      %p50 = por %p48, %p49
      %p51 = scmp.ne.s32.totalorder %s40, %s41
      %p52 = scmp.eq.s32.totalorder %s18, 0
      %p53 = por %p51, %p52
      %p54 = scmp.ne.s32.totalorder %s40, %s41
      %p55 = scmp.eq.s32.totalorder %s19, 3
      %p56 = por %p54, %p55
      %p58 = scmp.ne.s32.totalorder %s41, %s57
      %p59 = scmp.eq.s32.totalorder %s19, 0
      %p60 = por %p58, %p59
      %s62 = sadd.s32 %s61, 1
      %p65 = scmp.eq.s32.totalorder %s13, 3
      %p66 = scmp.ne.s32.totalorder %s61, %s63
      %p67 = scmp.eq.s32.totalorder %s13, 0
      %p68 = por %p66, %p67
      %p69 = scmp.ne.s32.totalorder %s61, %s63
      %p70 = scmp.eq.s32.totalorder %s18, 3
      %p71 = por %p69, %p70
      %p72 = scmp.ne.s32.totalorder %s63, %s64
      %p73 = scmp.eq.s32.totalorder %s18, 0
      %p74 = por %p72, %p73
      %p75 = scmp.ne.s32.totalorder %s63, %s64
      %p76 = scmp.eq.s32.totalorder %s19, 3
      %p77 = por %p75, %p76
      %p79 = scmp.ne.s32.totalorder %s64, %s78
      %p80 = scmp.eq.s32.totalorder %s19, 0
      %p81 = por %p79, %p80
      %s83 = sadd.s32 %s82, 1
      %p86 = scmp.eq.s32.totalorder %s13, 3
      %p87 = scmp.ne.s32.totalorder %s82, %s84
      %p88 = scmp.eq.s32.totalorder %s13, 0
      %p89 = por %p87, %p88
      %p90 = scmp.ne.s32.totalorder %s82, %s84
      %p91 = scmp.eq.s32.totalorder %s18, 3
      %p92 = por %p90, %p91
      %p93 = scmp.ne.s32.totalorder %s84, %s85
      %p94 = scmp.eq.s32.totalorder %s18, 0
      %p95 = por %p93, %p94
      %p96 = scmp.ne.s32.totalorder %s84, %s85
      %p97 = scmp.eq.s32.totalorder %s19, 3
      %p98 = por %p96, %p97
      %p100 = scmp.ne.s32.totalorder %s85, %s99
      %p101 = scmp.eq.s32.totalorder %s19, 0
      %p102 = por %p100, %p101
      %s104 = sadd.s32 %s103, 1
      %p107 = scmp.eq.s32.totalorder %s13, 3
      %p108 = scmp.ne.s32.totalorder %s103, %s105
      %p109 = scmp.eq.s32.totalorder %s13, 0
      %p110 = por %p108, %p109
      %p111 = scmp.ne.s32.totalorder %s103, %s105
      %p112 = scmp.eq.s32.totalorder %s18, 3
      %p113 = por %p111, %p112
      %p114 = scmp.ne.s32.totalorder %s105, %s106
      %p115 = scmp.eq.s32.totalorder %s18, 0
      %p116 = por %p114, %p115
      %p117 = scmp.ne.s32.totalorder %s105, %s106
      %p118 = scmp.eq.s32.totalorder %s19, 3
      %p119 = por %p117, %p118
      %p121 = scmp.ne.s32.totalorder %s106, %s120
      %p122 = scmp.eq.s32.totalorder %s19, 0
      %p123 = por %p121, %p122
      %s125 = sadd.s32 %s124, 1
      %p128 = scmp.eq.s32.totalorder %s13, 3
      %p129 = scmp.ne.s32.totalorder %s124, %s126
      %p130 = scmp.eq.s32.totalorder %s13, 0
      %p131 = por %p129, %p130
      %p132 = scmp.ne.s32.totalorder %s124, %s126
      %p133 = scmp.eq.s32.totalorder %s18, 3
      %p134 = por %p132, %p133
      %p135 = scmp.ne.s32.totalorder %s126, %s127
      %p136 = scmp.eq.s32.totalorder %s18, 0
      %p137 = por %p135, %p136
      %p138 = scmp.ne.s32.totalorder %s126, %s127
      %p139 = scmp.eq.s32.totalorder %s19, 3
      %p140 = por %p138, %p139
      %p142 = scmp.ne.s32.totalorder %s127, %s141
      %p143 = scmp.eq.s32.totalorder %s19, 0
      %p144 = por %p142, %p143
      %s145 = ssub.s32 %s20, %s32
      %s146 = ssub.s32 %s21, %s28
      %s147 = sor.u32 %s145, %s146
      %p148 = scmp.eq.s32.totalorder %s147, 0
      %s150 = sadd.s32 %s149, 1
      %s151 = scalar_select %p148, %s149, %s150
      %p154 = pneg %p148
      %p155 = scmp.eq.s32.totalorder %s13, 3
      %p156 = por %p154, %p155
      %p157 = scmp.ne.s32.totalorder %s149, %s152
      %p158 = scmp.eq.s32.totalorder %s13, 0
      %p159 = por %p157, %p158
      %p160 = scmp.ne.s32.totalorder %s149, %s152
      %p161 = scmp.eq.s32.totalorder %s18, 3
      %p162 = por %p160, %p161
      %p163 = scmp.ne.s32.totalorder %s152, %s153
      %p164 = scmp.eq.s32.totalorder %s18, 0
      %p165 = por %p163, %p164
      %p166 = scmp.ne.s32.totalorder %s152, %s153
      %p167 = scmp.eq.s32.totalorder %s19, 3
      %p168 = por %p166, %p167
      %p170 = scmp.ne.s32.totalorder %s153, %s169
      %p171 = scmp.eq.s32.totalorder %s19, 0
      %p172 = por %p170, %p171
      %s173 = ssub.s32 %s20, %s32
      %s174 = ssub.s32 %s21, %s28
      %s175 = sor.u32 %s173, %s174
      %p176 = scmp.eq.s32.totalorder %s175, 0
      %s178 = sadd.s32 %s177, 1
      %s179 = scalar_select %p176, %s177, %s178
      %p182 = pneg %p176
      %p183 = scmp.eq.s32.totalorder %s13, 3
      %p184 = por %p182, %p183
      %p185 = scmp.ne.s32.totalorder %s177, %s180
      %p186 = scmp.eq.s32.totalorder %s13, 0
      %p187 = por %p185, %p186
      %p188 = scmp.ne.s32.totalorder %s177, %s180
      %p189 = scmp.eq.s32.totalorder %s18, 3
      %p190 = por %p188, %p189
      %p191 = scmp.ne.s32.totalorder %s180, %s181
      %p192 = scmp.eq.s32.totalorder %s18, 0
      %p193 = por %p191, %p192
      %p194 = scmp.ne.s32.totalorder %s180, %s181
      %p195 = scmp.eq.s32.totalorder %s19, 3
      %p196 = por %p194, %p195
      %p198 = scmp.ne.s32.totalorder %s181, %s197
      %p199 = scmp.eq.s32.totalorder %s19, 0
      %p200 = por %p198, %p199
      %p201 = scmp.le.s32.totalorder 1, %s13
      %p202 = scmp.lt.s32.totalorder %s13, 5
      %p203 = pnand %p201, %p202
      %p204 = pneg %p203
      // Predicated region
      $region9: #{glore_unit_v2_forward.2} parent=5 // pred_check
        _
      $region10: #{glore_unit_v2_forward.2} parent=5 // pred_check_branch
        %206 = sbr.rel (%p203) target = $region12
      $region11: #{glore_unit_v2_forward.2} parent=5 // pred_region
        %s207 = ssub.s32 %s13, 1
        // Predicated region
        $region13: #{glore_unit_v2_forward.2} parent=11 // pred_check
          %p208 = pneg %p74
        $region14: #{glore_unit_v2_forward.2} parent=11 // pred_check_branch
          %210 = sbr.rel (%p208) target = $region16
        $region15: #{glore_unit_v2_forward.2} parent=11 // pred_region
          _
        $region16: #{glore_unit_v2_forward.2} parent=11 // pred_fallthru
          _
        // Predicated region
        $region17: #{glore_unit_v2_forward.2} parent=11 // pred_check
          %p211 = pneg %p95
        $region18: #{glore_unit_v2_forward.2} parent=11 // pred_check_branch
          %213 = sbr.rel (%p211) target = $region20
        $region19: #{glore_unit_v2_forward.2} parent=11 // pred_region
          _
        $region20: #{glore_unit_v2_forward.2} parent=11 // pred_fallthru
          _
        // Predicated region
        $region21: #{glore_unit_v2_forward.2} parent=11 // pred_check
          %p214 = pneg %p116
        $region22: #{glore_unit_v2_forward.2} parent=11 // pred_check_branch
          %216 = sbr.rel (%p214) target = $region24
        $region23: #{glore_unit_v2_forward.2} parent=11 // pred_region
          _
        $region24: #{glore_unit_v2_forward.2} parent=11 // pred_fallthru
          _
        // Predicated region
        $region25: #{glore_unit_v2_forward.2} parent=11 // pred_check
          %p217 = pneg %p137
        $region26: #{glore_unit_v2_forward.2} parent=11 // pred_check_branch
          %219 = sbr.rel (%p217) target = $region28
        $region27: #{glore_unit_v2_forward.2} parent=11 // pred_region
          _
        $region28: #{glore_unit_v2_forward.2} parent=11 // pred_fallthru
          _
      $region12: #{glore_unit_v2_forward.2} parent=5 // pred_fallthru
        _
      %p220 = scmp.lt.s32.totalorder %s13, 4
      // Predicated region
      $region29: #{glore_unit_v2_forward.2} parent=5 // pred_check
        %p221 = pneg %p220
      $region30: #{glore_unit_v2_forward.2} parent=5 // pred_check_branch
        %223 = sbr.rel (%p221) target = $region32
      $region31: #{glore_unit_v2_forward.2} parent=5 // pred_region
        // Predicated region
        $region33: #{glore_unit_v2_forward.2} parent=31 // pred_check
          %p224 = pneg %p47
        $region34: #{glore_unit_v2_forward.2} parent=31 // pred_check_branch
          %226 = sbr.rel (%p224) target = $region36
        $region35: #{glore_unit_v2_forward.2} parent=31 // pred_region
          %s227 = sand.u32 %s37, 1
          %s228 = sand.u32 %s37, 1
          %s229 = smul.addr %s228, 52
          %s230 = scalar_lea.vmem [#allocation2], %s229
          %s231 = smul.addr %s20, 26
          %s232 = sadd.s32 %s21, %s231
          %s233 = smul.addr %s232, 4
          %s234 = scalar_lea.vmem %s0, %s233
          // Predicated region
          $region37: #{glore_unit_v2_forward.2} parent=35 // pred_check
            _
          $region38: #{glore_unit_v2_forward.2} parent=35 // pred_check_branch
            %236 = sbr.rel (0) target = $region40
          $region39: #{glore_unit_v2_forward.2} parent=35 // pred_region
            // Predicated region
            $region41: #{glore_unit_v2_forward.2} parent=39 // pred_check
              _
            $region42: #{glore_unit_v2_forward.2} parent=39 // pred_check_branch
              %238 = sbr.rel target = $region44
            $region43: #{glore_unit_v2_forward.2} parent=39 // pred_region
              // Predicated region
              $region56: #{glore_unit_v2_forward.2} parent=43 // pred_check
                _
              $region57: #{glore_unit_v2_forward.2} parent=43 // pred_check_branch
                %277 = sbr.rel (0) target = $region59
              $region58: #{glore_unit_v2_forward.2} parent=43 // pred_region
                loop: start=0, step=1, limit=1
                $region60: #{glore_unit_v2_forward.2} parent=58 // loop_pre_header
                  _
                $region61: #{glore_unit_v2_forward.2} parent=58 // loop_header
                  %s279 = sphi 0, %s283
                  %p280 = scmp.ge.s32.totalorder %s279, 1
                  %s284 = sphi %s234, %s234
                  %s285 = sphi %s230, %s230
                $region62: #{glore_unit_v2_forward.2} parent=58 // loop_header_branch
                  %282 = sbr.rel (%p280) target = $region66
                $region63: #{glore_unit_v2_forward.2} parent=58 // loop_body
                  _
                $region64: #{glore_unit_v2_forward.2} parent=58 // loop_footer
                  %s283 = sadd.s32 1, %s279
                $region65: #{glore_unit_v2_forward.2} parent=58 // loop_footer_branch
                  %278 = sbr.rel target = $region61
                $region66: #{glore_unit_v2_forward.2} parent=58 // loop_exit
                  _
                loop: start=0, step=1, limit=1
                $region67: #{glore_unit_v2_forward.2} parent=58 // loop_pre_header
                  _
                $region68: #{glore_unit_v2_forward.2} parent=58 // loop_header
                  %s288 = sphi 0, %s292
                  %p289 = scmp.ge.s32.totalorder %s288, 1
                  %s293 = sphi %s234, %s234
                  %s294 = sphi %s230, %s230
                $region69: #{glore_unit_v2_forward.2} parent=58 // loop_header_branch
                  %291 = sbr.rel (%p289) target = $region73
                $region70: #{glore_unit_v2_forward.2} parent=58 // loop_body
                  %v295 = vld [vmem:[%s293] sm:$0xf]
                  %296 = vst [vmem:[%s294] sm:$0xf] %v295
                  %v297 = vld [vmem:[%s293 + $0x8] sm:$0xf]
                  %298 = vst [vmem:[%s294 + $0x4] sm:$0xf] %v297
                  %v299 = vld [vmem:[%s293 + $0x10] sm:$0xf]
                  %300 = vst [vmem:[%s294 + $0x8] sm:$0xf] %v299
                  %v301 = vld [vmem:[%s293 + $0x18] sm:$0xf]
                  %302 = vst [vmem:[%s294 + $0xc] sm:$0xf] %v301
                  %v303 = vld [vmem:[%s293 + $0x20] sm:$0xf]
                  %304 = vst [vmem:[%s294 + $0x10] sm:$0xf] %v303
                  %v305 = vld [vmem:[%s293 + $0x28] sm:$0xf]
                  %306 = vst [vmem:[%s294 + $0x14] sm:$0xf] %v305
                  %v307 = vld [vmem:[%s293 + $0x30] sm:$0xf]
                  %308 = vst [vmem:[%s294 + $0x18] sm:$0xf] %v307
                  %v309 = vld [vmem:[%s293 + $0x38] sm:$0xf]
                  %310 = vst [vmem:[%s294 + $0x1c] sm:$0xf] %v309
                  %v311 = vld [vmem:[%s293 + $0x40] sm:$0xf]
                  %312 = vst [vmem:[%s294 + $0x20] sm:$0xf] %v311
                  %v313 = vld [vmem:[%s293 + $0x48] sm:$0xf]
                  %314 = vst [vmem:[%s294 + $0x24] sm:$0xf] %v313
                  %v315 = vld [vmem:[%s293 + $0x50] sm:$0xf]
                  %316 = vst [vmem:[%s294 + $0x28] sm:$0xf] %v315
                  %v317 = vld [vmem:[%s293 + $0x58] sm:$0xf]
                  %318 = vst [vmem:[%s294 + $0x2c] sm:$0xf] %v317
                  %v319 = vld [vmem:[%s293 + $0x60] sm:$0xf]
                  %320 = vst [vmem:[%s294 + $0x30] sm:$0xf] %v319
                $region71: #{glore_unit_v2_forward.2} parent=58 // loop_footer
                  %s292 = sadd.s32 1, %s288
                $region72: #{glore_unit_v2_forward.2} parent=58 // loop_footer_branch
                  %287 = sbr.rel target = $region68
                $region73: #{glore_unit_v2_forward.2} parent=58 // loop_exit
                  _
              $region59: #{glore_unit_v2_forward.2} parent=43 // pred_fallthru
                _
            $region44: #{glore_unit_v2_forward.2} parent=39 // pred_fallthru
              _
            // Predicated region
            $region45: #{glore_unit_v2_forward.2} parent=39 // pred_check
              _
            $region46: #{glore_unit_v2_forward.2} parent=39 // pred_check_branch
              %240 = sbr.rel (0) target = $region48
            $region47: #{glore_unit_v2_forward.2} parent=39 // pred_region
              loop: start=0, step=1, limit=1
              $region49: #{glore_unit_v2_forward.2} parent=47 // loop_pre_header
                _
              $region50: #{glore_unit_v2_forward.2} parent=47 // loop_header
                %s243 = sphi 0, %s247
                %p244 = scmp.ge.s32.totalorder %s243, 1
                %s248 = sphi %s234, %s234
                %s249 = sphi %s230, %s230
              $region51: #{glore_unit_v2_forward.2} parent=47 // loop_header_branch
                %246 = sbr.rel (%p244) target = $region55
              $region52: #{glore_unit_v2_forward.2} parent=47 // loop_body
                %v250 = vld [vmem:[%s248] sm:$0xf]
                %251 = vst [vmem:[%s249] sm:$0xf] %v250
                %v252 = vld [vmem:[%s248 + $0x8] sm:$0xf]
                %253 = vst [vmem:[%s249 + $0x4] sm:$0xf] %v252
                %v254 = vld [vmem:[%s248 + $0x10] sm:$0xf]
                %255 = vst [vmem:[%s249 + $0x8] sm:$0xf] %v254
                %v256 = vld [vmem:[%s248 + $0x18] sm:$0xf]
                %257 = vst [vmem:[%s249 + $0xc] sm:$0xf] %v256
                %v258 = vld [vmem:[%s248 + $0x20] sm:$0xf]
                %259 = vst [vmem:[%s249 + $0x10] sm:$0xf] %v258
                %v260 = vld [vmem:[%s248 + $0x28] sm:$0xf]
                %261 = vst [vmem:[%s249 + $0x14] sm:$0xf] %v260
                %v262 = vld [vmem:[%s248 + $0x30] sm:$0xf]
                %263 = vst [vmem:[%s249 + $0x18] sm:$0xf] %v262
                %v264 = vld [vmem:[%s248 + $0x38] sm:$0xf]
                %265 = vst [vmem:[%s249 + $0x1c] sm:$0xf] %v264
                %v266 = vld [vmem:[%s248 + $0x40] sm:$0xf]
                %267 = vst [vmem:[%s249 + $0x20] sm:$0xf] %v266
                %v268 = vld [vmem:[%s248 + $0x48] sm:$0xf]
                %269 = vst [vmem:[%s249 + $0x24] sm:$0xf] %v268
                %v270 = vld [vmem:[%s248 + $0x50] sm:$0xf]
                %271 = vst [vmem:[%s249 + $0x28] sm:$0xf] %v270
                %v272 = vld [vmem:[%s248 + $0x58] sm:$0xf]
                %273 = vst [vmem:[%s249 + $0x2c] sm:$0xf] %v272
                %v274 = vld [vmem:[%s248 + $0x60] sm:$0xf]
                %275 = vst [vmem:[%s249 + $0x30] sm:$0xf] %v274
              $region53: #{glore_unit_v2_forward.2} parent=47 // loop_footer
                %s247 = sadd.s32 1, %s243
              $region54: #{glore_unit_v2_forward.2} parent=47 // loop_footer_branch
                %242 = sbr.rel target = $region50
              $region55: #{glore_unit_v2_forward.2} parent=47 // loop_exit
                _
            $region48: #{glore_unit_v2_forward.2} parent=39 // pred_fallthru
              _
          $region40: #{glore_unit_v2_forward.2} parent=35 // pred_fallthru
            _
          %321 = vnop
        $region36: #{glore_unit_v2_forward.2} parent=31 // pred_fallthru
          _
      $region32: #{glore_unit_v2_forward.2} parent=5 // pred_fallthru
        _
      %p322 = scmp.le.s32.totalorder 1, %s13
      %p323 = scmp.lt.s32.totalorder %s13, 5
      %p324 = pnand %p322, %p323
      %p325 = pneg %p324
      // Predicated region
      $region74: #{glore_unit_v2_forward.2} parent=5 // pred_check
        _
      $region75: #{glore_unit_v2_forward.2} parent=5 // pred_check_branch
        %327 = sbr.rel (%p324) target = $region77
      $region76: #{glore_unit_v2_forward.2} parent=5 // pred_region
        %s328 = ssub.s32 %s13, 1
        %s329 = sand.u32 %s40, 1
        %s330 = sand.u32 %s40, 1
        %s331 = smul.addr %s330, 52
        %s332 = scalar_lea.vmem [#allocation2], %s331
        // Predicated region
        $region78: #{glore_unit_v2_forward.2} parent=76 // pred_check
          %p333 = pneg %p53
        $region79: #{glore_unit_v2_forward.2} parent=76 // pred_check_branch
          %335 = sbr.rel (%p333) target = $region81
        $region80: #{glore_unit_v2_forward.2} parent=76 // pred_region
          _
        $region81: #{glore_unit_v2_forward.2} parent=76 // pred_fallthru
          _
        %s336 = sand.u32 %s40, 1
        %s337 = sand.u32 %s40, 1
        %s338 = smul.addr %s337, 52
        %s339 = scalar_lea.vmem [#allocation2], %s338
        %p340 = pneg %p53
        %p341 = pneg %p50
        %p342 = pneg %p74
        %p343 = pneg %p71
        %p344 = pneg %p95
        %p345 = pneg %p92
        %p346 = pneg %p116
        %p347 = pneg %p113
        %p348 = pneg %p137
        %p349 = pneg %p134
        %p350 = pneg %p165
        %p351 = pneg %p162
        %p352 = scmp.lt.s32.totalorder %s22, 1
        %s353 = scalar_select %p352, %s22, 1
        %p354 = scmp.lt.s32.totalorder %s23, 1
        %s355 = scalar_select %p354, %s23, 1
        %s356 = smul.addr %s353, 2
        %s357 = sadd.s32 %s355, %s356
        %s358 = smul.addr %s357, 4
        %s359 = scalar_lea.vmem %s5, %s358
        %p360 = pneg %p193
        %p361 = pneg %p190
        %p362 = scmp.lt.s32.totalorder %s22, 1
        %s363 = scalar_select %p362, %s22, 1
        %p364 = scmp.lt.s32.totalorder %s23, 1
        %s365 = scalar_select %p364, %s23, 1
        %s366 = smul.addr %s363, 2
        %s367 = sadd.s32 %s365, %s366
        %s368 = smul.addr %s367, 2
        %s369 = scalar_lea.vmem %s6, %s368
        %p370 = scmp.lt.s32.totalorder %s22, 1
        %s371 = scalar_select %p370, %s22, 1
        %p372 = scmp.lt.s32.totalorder %s23, 1
        %s373 = scalar_select %p372, %s23, 1
        %s374 = smul.addr %s371, 2
        %s375 = sadd.s32 %s373, %s374
        %s376 = smul.addr %s375, 4
        %s377 = scalar_lea.vmem %s5, %s376
        %p378 = scmp.lt.s32.totalorder %s22, 1
        %s379 = scalar_select %p378, %s22, 1
        %p380 = scmp.lt.s32.totalorder %s23, 1
        %s381 = scalar_select %p380, %s23, 1
        %s382 = smul.addr %s379, 2
        %s383 = sadd.s32 %s381, %s382
        %s384 = smul.addr %s383, 2
        %s385 = scalar_lea.vmem %s6, %s384
        %v387 = vld [vmem:[%s332] sm:$0xf]
        %v388 = vld [vmem:[%s332 + $0x4] sm:$0xf]
        %v389 = vld [vmem:[%s332 + $0x8] sm:$0xf]
        %v390 = vld [vmem:[%s332 + $0xc] sm:$0xf]
        %v391 = vld [vmem:[%s332 + $0x10] sm:$0xf]
        %v392 = vld [vmem:[%s332 + $0x14] sm:$0xf]
        %v393 = vld [vmem:[%s332 + $0x18] sm:$0xf]
        %v394 = vld [vmem:[%s332 + $0x1c] sm:$0xf]
        %v395 = vld [vmem:[%s332 + $0x20] sm:$0xf]
        %v396 = vld [vmem:[%s332 + $0x24] sm:$0xf]
        %v397 = vld [vmem:[%s332 + $0x28] sm:$0xf]
        %v398 = vld [vmem:[%s332 + $0x2c] sm:$0xf]
        %v399 = vld [vmem:[%s332 + $0x30] sm:$0xf]
        %v400 = vld [vmem:[%s1] sm:$0xf]
        %v401 = vld [vmem:[%s2] sm:$0xff]
        %403 = vset.pattern.permute.xlu0 0
        %404 = vperm.xlu0 %403, %v401
        %v405 = vpop.permute.xlu0 %404
        %v420 = vunpack.c.l.b16 %v387
        %v421 = vunpack.c.l.b16 %v388
        %v422 = vunpack.c.l.b16 %v389
        %v423 = vunpack.c.l.b16 %v390
        %v424 = vunpack.c.l.b16 %v391
        %v425 = vunpack.c.l.b16 %v392
        %v426 = vunpack.c.l.b16 %v393
        %v427 = vunpack.c.l.b16 %v394
        %v428 = vunpack.c.l.b16 %v395
        %v429 = vunpack.c.l.b16 %v396
        %v430 = vunpack.c.l.b16 %v397
        %v431 = vunpack.c.l.b16 %v398
        %v432 = vunpack.c.l.b16 %v399
        %v433 = vpack.c.b16 %v421, %v420
        %v434 = vpack.c.b16 %v423, %v422
        %v435 = vpack.c.b16 %v425, %v424
        %v436 = vpack.c.b16 %v427, %v426
        %v437 = vpack.c.b16 %v429, %v428
        %v438 = vpack.c.b16 %v431, %v430
        %v439 = vpack.c.b16 %v432, %v432
        %vm446 = vcmask 850944
        %v448 = vsel %vm446, %v400, 0
        %vm450 = vcmask 1043456
        %v452 = vsel %vm450, %v439, 0
        %454 = vmatprep.subr.bf16.mxu0 0
        %455 = vmatpush1.bf16.msra.mxu0 %v433
        %456 = vmatprep.subr.bf16.mxu0 0
        %457 = vmatpush1.bf16.msra.mxu0 %v434
        %458 = vmatprep.subr.bf16.mxu0 0
        %459 = vmatpush1.bf16.msra.mxu0 %v435
        %460 = vmatprep.subr.bf16.mxu0 0
        %461 = vmatpush1.bf16.msra.mxu0 %v436
        %462 = vmatprep.subr.bf16.mxu0 0
        %463 = vmatpush1.bf16.msra.mxu0 %v437
        %464 = vmatprep.subr.bf16.mxu0 0
        %465 = vmatpush1.bf16.msra.mxu0 %v438
        %466 = vmatprep.subr.bf16.mxu0 0
        %467 = vmatpush1.bf16.msra.mxu0 %v452
        %468 = vmatprep.subr.bf16.mxu0 0
        %469 = vmatpush1.bf16.msra.mxu0 0
        %470 = vmatprep.subr.bf16.mxu0 0
        %471 = vmatpush1.bf16.msra.mxu0 0
        %472 = vmatprep.subr.bf16.mxu0 0
        %473 = vmatpush1.bf16.msra.mxu0 0
        %474 = vmatprep.subr.bf16.mxu0 0
        %475 = vmatpush1.bf16.msra.mxu0 0
        %476 = vmatprep.subr.bf16.mxu0 0
        %477 = vmatpush1.bf16.msra.mxu0 0
        %478 = vmatprep.subr.bf16.mxu0 0
        %479 = vmatpush1.bf16.msra.mxu0 0
        %480 = vmatprep.subr.bf16.mxu0 0
        %481 = vmatpush1.bf16.msra.mxu0 0
        %482 = vmatprep.subr.bf16.mxu0 0
        %483 = vmatpush1.bf16.msra.mxu0 0
        %484 = vmatprep.subr.bf16.mxu0 0
        %485 = vmatpush1.bf16.msra.mxu0 0
        %486 = vmatprep.mubr.bf16.mxu0 0
        %487 = vmatmul.mubr.bf16.gmra.mrb[0].mxu0 %v448
        %v488 = vpop.f32.mrb[0].mxu0
        %v489 = vadd.f32 %v405, %v488
        %v490 = vpop.f32.mrb[0].mxu0
        %v491 = vpop.f32.mrb[0].mxu0
        %v492 = vpop.f32.mrb[0].mxu0
        %493 = vdwg.mxu0
        %v494 = vld [vmem:[%s3] sm:$0x3]
        %v495 = vld [vmem:[%s4] sm:$0xf]
        %497 = vset.pattern.permute.xlu0 0
        %498 = vperm.xlu0 %497, %v495
        %v499 = vpop.permute.xlu0 %498
        %v502 = vsel %vm446, %v494, 0
        %504 = vmatprep.subr.bf16.mxu0 0
        %505 = vmatpush1.bf16.msra.mxu0 %v433
        %506 = vmatprep.subr.bf16.mxu0 0
        %507 = vmatpush1.bf16.msra.mxu0 %v434
        %508 = vmatprep.subr.bf16.mxu0 0
        %509 = vmatpush1.bf16.msra.mxu0 %v435
        %510 = vmatprep.subr.bf16.mxu0 0
        %511 = vmatpush1.bf16.msra.mxu0 %v436
        %512 = vmatprep.subr.bf16.mxu0 0
        %513 = vmatpush1.bf16.msra.mxu0 %v437
        %514 = vmatprep.subr.bf16.mxu0 0
        %515 = vmatpush1.bf16.msra.mxu0 %v438
        %516 = vmatprep.subr.bf16.mxu0 0
        %517 = vmatpush1.bf16.msra.mxu0 %v452
        %518 = vmatprep.subr.bf16.mxu0 0
        %519 = vmatpush1.bf16.msra.mxu0 0
        %520 = vmatprep.subr.bf16.mxu0 0
        %521 = vmatpush1.bf16.msra.mxu0 0
        %522 = vmatprep.subr.bf16.mxu0 0
        %523 = vmatpush1.bf16.msra.mxu0 0
        %524 = vmatprep.subr.bf16.mxu0 0
        %525 = vmatpush1.bf16.msra.mxu0 0
        %526 = vmatprep.subr.bf16.mxu0 0
        %527 = vmatpush1.bf16.msra.mxu0 0
        %528 = vmatprep.subr.bf16.mxu0 0
        %529 = vmatpush1.bf16.msra.mxu0 0
        %530 = vmatprep.subr.bf16.mxu0 0
        %531 = vmatpush1.bf16.msra.mxu0 0
        %532 = vmatprep.subr.bf16.mxu0 0
        %533 = vmatpush1.bf16.msra.mxu0 0
        %534 = vmatprep.subr.bf16.mxu0 0
        %535 = vmatpush1.bf16.msra.mxu0 0
        %536 = vmatprep.mubr.bf16.mxu0 0
        %537 = vmatmul.mubr.bf16.gmra.mrb[0].mxu0 %v502
        %v538 = vpop.f32.mrb[0].mxu0
        %v539 = vadd.f32 %v499, %v538
        %v540 = vpop.f32.mrb[0].mxu0
        %v541 = vpop.f32.mrb[0].mxu0
        %v542 = vpop.f32.mrb[0].mxu0
        %543 = vdwg.mxu0
        %v544 = vpack.c.bf16 %v489, %v489
        %545 = vst [vmem:[%s377] sm:$0xf] %v544
        %v546 = vpack.c.bf16 %v539, %v539
        %547 = vst [vmem:[%s385] sm:$0x3] %v546
        %p548 = scmp.lt.s32.totalorder %s22, 1
        %s549 = scalar_select %p548, %s22, 1
        %p550 = scmp.lt.s32.totalorder %s23, 1
        %s551 = scalar_select %p550, %s23, 1
        %s552 = smul.addr %s549, 2
        %s553 = sadd.s32 %s551, %s552
        %s554 = smul.addr %s553, 4
        %s555 = scalar_lea.vmem %s5, %s554
        %p556 = scmp.lt.s32.totalorder %s22, 1
        %s557 = scalar_select %p556, %s22, 1
        %p558 = scmp.lt.s32.totalorder %s23, 1
        %s559 = scalar_select %p558, %s23, 1
        %s560 = smul.addr %s557, 2
        %s561 = sadd.s32 %s559, %s560
        %s562 = smul.addr %s561, 2
        %s563 = scalar_lea.vmem %s6, %s562
        // Predicated region
        $region82: #{glore_unit_v2_forward.2} parent=76 // pred_check
          %p564 = pneg %p162
        $region83: #{glore_unit_v2_forward.2} parent=76 // pred_check_branch
          %566 = sbr.rel (%p564) target = $region85
        $region84: #{glore_unit_v2_forward.2} parent=76 // pred_region
          _
        $region85: #{glore_unit_v2_forward.2} parent=76 // pred_fallthru
          _
        // Predicated region
        $region86: #{glore_unit_v2_forward.2} parent=76 // pred_check
          %p567 = pneg %p190
        $region87: #{glore_unit_v2_forward.2} parent=76 // pred_check_branch
          %569 = sbr.rel (%p567) target = $region89
        $region88: #{glore_unit_v2_forward.2} parent=76 // pred_region
          _
        $region89: #{glore_unit_v2_forward.2} parent=76 // pred_fallthru
          _
      $region77: #{glore_unit_v2_forward.2} parent=5 // pred_fallthru
        _
      %p570 = scmp.le.s32.totalorder 2, %s13
      // Predicated region
      $region90: #{glore_unit_v2_forward.2} parent=5 // pred_check
        %p571 = pneg %p570
      $region91: #{glore_unit_v2_forward.2} parent=5 // pred_check_branch
        %573 = sbr.rel (%p571) target = $region93
      $region92: #{glore_unit_v2_forward.2} parent=5 // pred_region
        %s574 = ssub.s32 %s13, 2
        // Predicated region
        $region94: #{glore_unit_v2_forward.2} parent=92 // pred_check
          %p575 = pneg %p168
        $region95: #{glore_unit_v2_forward.2} parent=92 // pred_check_branch
          %577 = sbr.rel (%p575) target = $region97
        $region96: #{glore_unit_v2_forward.2} parent=92 // pred_region
          %p578 = scmp.lt.s32.totalorder %s24, 1
          %s579 = scalar_select %p578, %s24, 1
          %p580 = scmp.lt.s32.totalorder %s25, 1
          %s581 = scalar_select %p580, %s25, 1
          %s582 = smul.addr %s579, 2
          %s583 = sadd.s32 %s581, %s582
          %s584 = smul.addr %s583, 4
          %s585 = scalar_lea.vmem %s5, %s584
        $region97: #{glore_unit_v2_forward.2} parent=92 // pred_fallthru
          _
        // Predicated region
        $region98: #{glore_unit_v2_forward.2} parent=92 // pred_check
          %p586 = pneg %p196
        $region99: #{glore_unit_v2_forward.2} parent=92 // pred_check_branch
          %588 = sbr.rel (%p586) target = $region101
        $region100: #{glore_unit_v2_forward.2} parent=92 // pred_region
          %p589 = scmp.lt.s32.totalorder %s24, 1
          %s590 = scalar_select %p589, %s24, 1
          %p591 = scmp.lt.s32.totalorder %s25, 1
          %s592 = scalar_select %p591, %s25, 1
          %s593 = smul.addr %s590, 2
          %s594 = sadd.s32 %s592, %s593
          %s595 = smul.addr %s594, 2
          %s596 = scalar_lea.vmem %s6, %s595
        $region101: #{glore_unit_v2_forward.2} parent=92 // pred_fallthru
          _
      $region93: #{glore_unit_v2_forward.2} parent=5 // pred_fallthru
        _
    $region6: #{glore_unit_v2_forward.2} parent=1 // loop_footer
      %s17 = sadd.s32 1, %s13
    $region7: #{glore_unit_v2_forward.2} parent=1 // loop_footer_branch
      %12 = sbr.rel target = $region3
    $region8: #{glore_unit_v2_forward.2} parent=1 // loop_exit
      _

// kernel: glore_unit_v2_forward.3
$region0: #{glore_unit_v2_forward.3}
  #allocation0 [shape = 'u32[]', space=smem, size = 0x4, offset = 0x4, fixed_abs, tag = 'smem constant byte address 0x4 - core index']
  #allocation1 [shape = 'u32[144,128]{1,0:T(1,128)}', space=vmem, size = 0x12000, scoped, tag = 'internal scratch']
  #allocation2 [shape = 'f32[4,4]{1,0:T(4,128)}', space=vmem, size = 0x800, scoped, tag = 'scratch operand']
  %s0 = inlined_call_operand.vmem [shape: bf16[2,8,256], index: 0, kind: input, shape index: {}]
  %s1 = inlined_call_operand.vmem [shape: bf16[2,4,256], index: 1, kind: input, shape index: {}, may-alias: {1,2}]
  %s2 = inlined_call_operand.vmem [shape: bf16[2,4,256], index: 2, kind: input, shape index: {}, may-alias: {1,2}]
  %s3 = inlined_call_operand.vmem [shape: f32[2,4,256], index: 3, kind: input, shape index: {}]
  %s4 = inlined_call_operand.vmem [shape: f32[4,8], index: 4, kind: input, shape index: {}]
  %s5 = inlined_call_operand.vmem [shape: f32[4,1], index: 5, kind: input, shape index: {}]
  %s6 = inlined_call_operand.vmem [shape: f32[4,1], index: 6, kind: input, shape index: {}]
  %s7 = inlined_call_operand.vmem [shape: f32[4,4], index: 7, kind: input, shape index: {}]
  %s8 = inlined_call_operand.vmem [shape: f32[1,4], index: 8, kind: input, shape index: {}]
  %s9 = inlined_call_operand.vmem [shape: f32[8,8], index: 9, kind: input, shape index: {}]
  %s10 = inlined_call_operand.vmem [shape: f32[2,4,256], index: 10, kind: output, shape index: {}]
  %s11 = sld [smem:[#allocation0]]
  $region77: #{glore_unit_v2_forward.3} parent=0
    _
  %s13 = ssub.s32 1, %s11
  %s14 = scalar_select 0, %s13, %s11
  loop: start=0, step=1, limit=6
  $region2: #{glore_unit_v2_forward.3} parent=0 // loop_pre_header
    _
  $region3: #{glore_unit_v2_forward.3} parent=0 // loop_header
    %s16 = sphi 0, %s20
    %p17 = scmp.ge.s32.totalorder %s16, 6
    %s23 = sphi 0, %s35
    %s24 = sphi 0, %s31
    %s25 = sphi 0, %s23
    %s26 = sphi 0, %s24
    %s27 = sphi 0, %s25
    %s28 = sphi 0, %s26
    %s38 = sphi 0, %s40
    %s41 = sphi 0, %s38
    %s42 = sphi 0, %s41
    %s58 = sphi 0, %s42
    %s64 = sphi 0, %s66
    %s67 = sphi 0, %s64
    %s68 = sphi 0, %s67
    %s84 = sphi 0, %s68
    %s92 = sphi 0, %s94
    %s95 = sphi 0, %s92
    %s96 = sphi 0, %s95
    %s112 = sphi 0, %s96
    %s120 = sphi 0, %s122
    %s123 = sphi 0, %s120
    %s124 = sphi 0, %s123
    %s140 = sphi 0, %s124
    %s144 = sphi 0, %s144
    %s146 = sphi 0, %s144
    %s147 = sphi 0, %s146
    %s161 = sphi 0, %s147
    %s165 = sphi 0, %s165
    %s167 = sphi 0, %s165
    %s168 = sphi 0, %s167
    %s182 = sphi 0, %s168
    %s186 = sphi 0, %s186
    %s188 = sphi 0, %s186
    %s189 = sphi 0, %s188
    %s203 = sphi 0, %s189
    %s207 = sphi 0, %s207
    %s209 = sphi 0, %s207
    %s210 = sphi 0, %s209
    %s224 = sphi 0, %s210
    %s228 = sphi 0, %s228
    %s230 = sphi 0, %s228
    %s231 = sphi 0, %s230
    %s245 = sphi 0, %s231
    %s249 = sphi 0, %s249
    %s251 = sphi 0, %s249
    %s252 = sphi 0, %s251
    %s266 = sphi 0, %s252
    %s274 = sphi 0, %s276
    %s277 = sphi 0, %s274
    %s278 = sphi 0, %s277
    %s294 = sphi 0, %s278
  $region4: #{glore_unit_v2_forward.3} parent=0 // loop_header_branch
    %19 = sbr.rel (%p17) target = $region8
  $region5: #{glore_unit_v2_forward.3} parent=0 // loop_body
    %s21 = ssub.s32 %s16, 1
    %s22 = ssub.s32 %s16, 2
    %s29 = sadd.s32 1, %s24
    %p30 = scmp.ge.s32.totalorder %s29, 2
    %s31 = scalar_select %p30, 0, %s29
    %s32 = sadd.s32 1, %s23
    %s33 = scalar_select %p30, %s32, %s23
    %p34 = scmp.ge.s32.totalorder %s33, 2
    %s35 = scalar_select %p34, 0, %s33
    %s36 = ssub.s32 %s23, %s35
    %p37 = scmp.eq.s32.totalorder %s36, 0
    %s39 = sadd.s32 %s38, 1
    %s40 = scalar_select %p37, %s38, %s39
    %p43 = pneg %p37
    %p44 = scmp.eq.s32.totalorder %s16, 3
    %p45 = por %p43, %p44
    %p46 = scmp.ne.s32.totalorder %s38, %s41
    %p47 = scmp.eq.s32.totalorder %s16, 0
    %p48 = por %p46, %p47
    %p49 = scmp.ne.s32.totalorder %s38, %s41
    %p50 = scmp.eq.s32.totalorder %s21, 3
    %p51 = por %p49, %p50
    %p52 = scmp.ne.s32.totalorder %s41, %s42
    %p53 = scmp.eq.s32.totalorder %s21, 0
    %p54 = por %p52, %p53
    %p55 = scmp.ne.s32.totalorder %s41, %s42
    %p56 = scmp.eq.s32.totalorder %s22, 3
    %p57 = por %p55, %p56
    %p59 = scmp.ne.s32.totalorder %s42, %s58
    %p60 = scmp.eq.s32.totalorder %s22, 0
    %p61 = por %p59, %p60
    %s62 = ssub.s32 %s23, %s35
    %p63 = scmp.eq.s32.totalorder %s62, 0
    %s65 = sadd.s32 %s64, 1
    %s66 = scalar_select %p63, %s64, %s65
    %p69 = pneg %p63
    %p70 = scmp.eq.s32.totalorder %s16, 3
    %p71 = por %p69, %p70
    %p72 = scmp.ne.s32.totalorder %s64, %s67
    %p73 = scmp.eq.s32.totalorder %s16, 0
    %p74 = por %p72, %p73
    %p75 = scmp.ne.s32.totalorder %s64, %s67
    %p76 = scmp.eq.s32.totalorder %s21, 3
    %p77 = por %p75, %p76
    %p78 = scmp.ne.s32.totalorder %s67, %s68
    %p79 = scmp.eq.s32.totalorder %s21, 0
    %p80 = por %p78, %p79
    %p81 = scmp.ne.s32.totalorder %s67, %s68
    %p82 = scmp.eq.s32.totalorder %s22, 3
    %p83 = por %p81, %p82
    %p85 = scmp.ne.s32.totalorder %s68, %s84
    %p86 = scmp.eq.s32.totalorder %s22, 0
    %p87 = por %p85, %p86
    %s88 = ssub.s32 %s23, %s35
    %s89 = ssub.s32 %s24, %s31
    %s90 = sor.u32 %s88, %s89
    %p91 = scmp.eq.s32.totalorder %s90, 0
    %s93 = sadd.s32 %s92, 1
    %s94 = scalar_select %p91, %s92, %s93
    %p97 = pneg %p91
    %p98 = scmp.eq.s32.totalorder %s16, 3
    %p99 = por %p97, %p98
    %p100 = scmp.ne.s32.totalorder %s92, %s95
    %p101 = scmp.eq.s32.totalorder %s16, 0
    %p102 = por %p100, %p101
    %p103 = scmp.ne.s32.totalorder %s92, %s95
    %p104 = scmp.eq.s32.totalorder %s21, 3
    %p105 = por %p103, %p104
    %p106 = scmp.ne.s32.totalorder %s95, %s96
    %p107 = scmp.eq.s32.totalorder %s21, 0
    %p108 = por %p106, %p107
    %p109 = scmp.ne.s32.totalorder %s95, %s96
    %p110 = scmp.eq.s32.totalorder %s22, 3
    %p111 = por %p109, %p110
    %p113 = scmp.ne.s32.totalorder %s96, %s112
    %p114 = scmp.eq.s32.totalorder %s22, 0
    %p115 = por %p113, %p114
    %s116 = ssub.s32 %s23, %s35
    %s117 = ssub.s32 %s24, %s31
    %s118 = sor.u32 %s116, %s117
    %p119 = scmp.eq.s32.totalorder %s118, 0
    %s121 = sadd.s32 %s120, 1
    %s122 = scalar_select %p119, %s120, %s121
    %p125 = pneg %p119
    %p126 = scmp.eq.s32.totalorder %s16, 3
    %p127 = por %p125, %p126
    %p128 = scmp.ne.s32.totalorder %s120, %s123
    %p129 = scmp.eq.s32.totalorder %s16, 0
    %p130 = por %p128, %p129
    %p131 = scmp.ne.s32.totalorder %s120, %s123
    %p132 = scmp.eq.s32.totalorder %s21, 3
    %p133 = por %p131, %p132
    %p134 = scmp.ne.s32.totalorder %s123, %s124
    %p135 = scmp.eq.s32.totalorder %s21, 0
    %p136 = por %p134, %p135
    %p137 = scmp.ne.s32.totalorder %s123, %s124
    %p138 = scmp.eq.s32.totalorder %s22, 3
    %p139 = por %p137, %p138
    %p141 = scmp.ne.s32.totalorder %s124, %s140
    %p142 = scmp.eq.s32.totalorder %s22, 0
    %p143 = por %p141, %p142
    %s145 = sadd.s32 %s144, 1
    %p148 = scmp.eq.s32.totalorder %s16, 3
    %p149 = scmp.ne.s32.totalorder %s144, %s146
    %p150 = scmp.eq.s32.totalorder %s16, 0
    %p151 = por %p149, %p150
    %p152 = scmp.ne.s32.totalorder %s144, %s146
    %p153 = scmp.eq.s32.totalorder %s21, 3
    %p154 = por %p152, %p153
    %p155 = scmp.ne.s32.totalorder %s146, %s147
    %p156 = scmp.eq.s32.totalorder %s21, 0
    %p157 = por %p155, %p156
    %p158 = scmp.ne.s32.totalorder %s146, %s147
    %p159 = scmp.eq.s32.totalorder %s22, 3
    %p160 = por %p158, %p159
    %p162 = scmp.ne.s32.totalorder %s147, %s161
    %p163 = scmp.eq.s32.totalorder %s22, 0
    %p164 = por %p162, %p163
    %s166 = sadd.s32 %s165, 1
    %p169 = scmp.eq.s32.totalorder %s16, 3
    %p170 = scmp.ne.s32.totalorder %s165, %s167
    %p171 = scmp.eq.s32.totalorder %s16, 0
    %p172 = por %p170, %p171
    %p173 = scmp.ne.s32.totalorder %s165, %s167
    %p174 = scmp.eq.s32.totalorder %s21, 3
    %p175 = por %p173, %p174
    %p176 = scmp.ne.s32.totalorder %s167, %s168
    %p177 = scmp.eq.s32.totalorder %s21, 0
    %p178 = por %p176, %p177
    %p179 = scmp.ne.s32.totalorder %s167, %s168
    %p180 = scmp.eq.s32.totalorder %s22, 3
    %p181 = por %p179, %p180
    %p183 = scmp.ne.s32.totalorder %s168, %s182
    %p184 = scmp.eq.s32.totalorder %s22, 0
    %p185 = por %p183, %p184
    %s187 = sadd.s32 %s186, 1
    %p190 = scmp.eq.s32.totalorder %s16, 3
    %p191 = scmp.ne.s32.totalorder %s186, %s188
    %p192 = scmp.eq.s32.totalorder %s16, 0
    %p193 = por %p191, %p192
    %p194 = scmp.ne.s32.totalorder %s186, %s188
    %p195 = scmp.eq.s32.totalorder %s21, 3
    %p196 = por %p194, %p195
    %p197 = scmp.ne.s32.totalorder %s188, %s189
    %p198 = scmp.eq.s32.totalorder %s21, 0
    %p199 = por %p197, %p198
    %p200 = scmp.ne.s32.totalorder %s188, %s189
    %p201 = scmp.eq.s32.totalorder %s22, 3
    %p202 = por %p200, %p201
    %p204 = scmp.ne.s32.totalorder %s189, %s203
    %p205 = scmp.eq.s32.totalorder %s22, 0
    %p206 = por %p204, %p205
    %s208 = sadd.s32 %s207, 1
    %p211 = scmp.eq.s32.totalorder %s16, 3
    %p212 = scmp.ne.s32.totalorder %s207, %s209
    %p213 = scmp.eq.s32.totalorder %s16, 0
    %p214 = por %p212, %p213
    %p215 = scmp.ne.s32.totalorder %s207, %s209
    %p216 = scmp.eq.s32.totalorder %s21, 3
    %p217 = por %p215, %p216
    %p218 = scmp.ne.s32.totalorder %s209, %s210
    %p219 = scmp.eq.s32.totalorder %s21, 0
    %p220 = por %p218, %p219
    %p221 = scmp.ne.s32.totalorder %s209, %s210
    %p222 = scmp.eq.s32.totalorder %s22, 3
    %p223 = por %p221, %p222
    %p225 = scmp.ne.s32.totalorder %s210, %s224
    %p226 = scmp.eq.s32.totalorder %s22, 0
    %p227 = por %p225, %p226
    %s229 = sadd.s32 %s228, 1
    %p232 = scmp.eq.s32.totalorder %s16, 3
    %p233 = scmp.ne.s32.totalorder %s228, %s230
    %p234 = scmp.eq.s32.totalorder %s16, 0
    %p235 = por %p233, %p234
    %p236 = scmp.ne.s32.totalorder %s228, %s230
    %p237 = scmp.eq.s32.totalorder %s21, 3
    %p238 = por %p236, %p237
    %p239 = scmp.ne.s32.totalorder %s230, %s231
    %p240 = scmp.eq.s32.totalorder %s21, 0
    %p241 = por %p239, %p240
    %p242 = scmp.ne.s32.totalorder %s230, %s231
    %p243 = scmp.eq.s32.totalorder %s22, 3
    %p244 = por %p242, %p243
    %p246 = scmp.ne.s32.totalorder %s231, %s245
    %p247 = scmp.eq.s32.totalorder %s22, 0
    %p248 = por %p246, %p247
    %s250 = sadd.s32 %s249, 1
    %p253 = scmp.eq.s32.totalorder %s16, 3
    %p254 = scmp.ne.s32.totalorder %s249, %s251
    %p255 = scmp.eq.s32.totalorder %s16, 0
    %p256 = por %p254, %p255
    %p257 = scmp.ne.s32.totalorder %s249, %s251
    %p258 = scmp.eq.s32.totalorder %s21, 3
    %p259 = por %p257, %p258
    %p260 = scmp.ne.s32.totalorder %s251, %s252
    %p261 = scmp.eq.s32.totalorder %s21, 0
    %p262 = por %p260, %p261
    %p263 = scmp.ne.s32.totalorder %s251, %s252
    %p264 = scmp.eq.s32.totalorder %s22, 3
    %p265 = por %p263, %p264
    %p267 = scmp.ne.s32.totalorder %s252, %s266
    %p268 = scmp.eq.s32.totalorder %s22, 0
    %p269 = por %p267, %p268
    %s270 = ssub.s32 %s23, %s35
    %s271 = ssub.s32 %s24, %s31
    %s272 = sor.u32 %s270, %s271
    %p273 = scmp.eq.s32.totalorder %s272, 0
    %s275 = sadd.s32 %s274, 1
    %s276 = scalar_select %p273, %s274, %s275
    %p279 = pneg %p273
    %p280 = scmp.eq.s32.totalorder %s16, 3
    %p281 = por %p279, %p280
    %p282 = scmp.ne.s32.totalorder %s274, %s277
    %p283 = scmp.eq.s32.totalorder %s16, 0
    %p284 = por %p282, %p283
    %p285 = scmp.ne.s32.totalorder %s274, %s277
    %p286 = scmp.eq.s32.totalorder %s21, 3
    %p287 = por %p285, %p286
    %p288 = scmp.ne.s32.totalorder %s277, %s278
    %p289 = scmp.eq.s32.totalorder %s21, 0
    %p290 = por %p288, %p289
    %p291 = scmp.ne.s32.totalorder %s277, %s278
    %p292 = scmp.eq.s32.totalorder %s22, 3
    %p293 = por %p291, %p292
    %p295 = scmp.ne.s32.totalorder %s278, %s294
    %p296 = scmp.eq.s32.totalorder %s22, 0
    %p297 = por %p295, %p296
    %p298 = scmp.le.s32.totalorder 1, %s16
    %p299 = scmp.lt.s32.totalorder %s16, 5
    %p300 = pnand %p298, %p299
    %p301 = pneg %p300
    // Predicated region
    $region9: #{glore_unit_v2_forward.3} parent=5 // pred_check
      _
    $region10: #{glore_unit_v2_forward.3} parent=5 // pred_check_branch
      %303 = sbr.rel (%p300) target = $region12
    $region11: #{glore_unit_v2_forward.3} parent=5 // pred_region
      %s304 = ssub.s32 %s16, 1
      // Predicated region
      $region13: #{glore_unit_v2_forward.3} parent=11 // pred_check
        %p305 = pneg %p157
      $region14: #{glore_unit_v2_forward.3} parent=11 // pred_check_branch
        %307 = sbr.rel (%p305) target = $region16
      $region15: #{glore_unit_v2_forward.3} parent=11 // pred_region
        _
      $region16: #{glore_unit_v2_forward.3} parent=11 // pred_fallthru
        _
      // Predicated region
      $region17: #{glore_unit_v2_forward.3} parent=11 // pred_check
        %p308 = pneg %p178
      $region18: #{glore_unit_v2_forward.3} parent=11 // pred_check_branch
        %310 = sbr.rel (%p308) target = $region20
      $region19: #{glore_unit_v2_forward.3} parent=11 // pred_region
        _
      $region20: #{glore_unit_v2_forward.3} parent=11 // pred_fallthru
        _
      // Predicated region
      $region21: #{glore_unit_v2_forward.3} parent=11 // pred_check
        %p311 = pneg %p199
      $region22: #{glore_unit_v2_forward.3} parent=11 // pred_check_branch
        %313 = sbr.rel (%p311) target = $region24
      $region23: #{glore_unit_v2_forward.3} parent=11 // pred_region
        _
      $region24: #{glore_unit_v2_forward.3} parent=11 // pred_fallthru
        _
      // Predicated region
      $region25: #{glore_unit_v2_forward.3} parent=11 // pred_check
        %p314 = pneg %p220
      $region26: #{glore_unit_v2_forward.3} parent=11 // pred_check_branch
        %316 = sbr.rel (%p314) target = $region28
      $region27: #{glore_unit_v2_forward.3} parent=11 // pred_region
        _
      $region28: #{glore_unit_v2_forward.3} parent=11 // pred_fallthru
        _
      // Predicated region
      $region29: #{glore_unit_v2_forward.3} parent=11 // pred_check
        %p317 = pneg %p241
      $region30: #{glore_unit_v2_forward.3} parent=11 // pred_check_branch
        %319 = sbr.rel (%p317) target = $region32
      $region31: #{glore_unit_v2_forward.3} parent=11 // pred_region
        _
      $region32: #{glore_unit_v2_forward.3} parent=11 // pred_fallthru
        _
      // Predicated region
      $region33: #{glore_unit_v2_forward.3} parent=11 // pred_check
        %p320 = pneg %p262
      $region34: #{glore_unit_v2_forward.3} parent=11 // pred_check_branch
        %322 = sbr.rel (%p320) target = $region36
      $region35: #{glore_unit_v2_forward.3} parent=11 // pred_region
        _
      $region36: #{glore_unit_v2_forward.3} parent=11 // pred_fallthru
        _
    $region12: #{glore_unit_v2_forward.3} parent=5 // pred_fallthru
      _
    %p323 = scmp.lt.s32.totalorder %s16, 4
    // Predicated region
    $region37: #{glore_unit_v2_forward.3} parent=5 // pred_check
      %p324 = pneg %p323
    $region38: #{glore_unit_v2_forward.3} parent=5 // pred_check_branch
      %326 = sbr.rel (%p324) target = $region40
    $region39: #{glore_unit_v2_forward.3} parent=5 // pred_region
      // Predicated region
      $region41: #{glore_unit_v2_forward.3} parent=39 // pred_check
        %p327 = pneg %p48
      $region42: #{glore_unit_v2_forward.3} parent=39 // pred_check_branch
        %329 = sbr.rel (%p327) target = $region44
      $region43: #{glore_unit_v2_forward.3} parent=39 // pred_region
        %p330 = scmp.lt.s32.totalorder %s23, 1
        %s331 = scalar_select %p330, %s23, 1
        %s332 = smul.addr %s331, 2
        %s333 = smul.addr %s332, 4
        %s334 = scalar_lea.vmem %s0, %s333
      $region44: #{glore_unit_v2_forward.3} parent=39 // pred_fallthru
        _
      // Predicated region
      $region45: #{glore_unit_v2_forward.3} parent=39 // pred_check
        %p335 = pneg %p74
      $region46: #{glore_unit_v2_forward.3} parent=39 // pred_check_branch
        %337 = sbr.rel (%p335) target = $region48
      $region47: #{glore_unit_v2_forward.3} parent=39 // pred_region
        %p338 = scmp.lt.s32.totalorder %s23, 1
        %s339 = scalar_select %p338, %s23, 1
        %s340 = smul.addr %s339, 2
        %s341 = smul.addr %s340, 2
        %s342 = scalar_lea.vmem %s1, %s341
      $region48: #{glore_unit_v2_forward.3} parent=39 // pred_fallthru
        _
      // Predicated region
      $region49: #{glore_unit_v2_forward.3} parent=39 // pred_check
        %p343 = pneg %p102
      $region50: #{glore_unit_v2_forward.3} parent=39 // pred_check_branch
        %345 = sbr.rel (%p343) target = $region52
      $region51: #{glore_unit_v2_forward.3} parent=39 // pred_region
        %p346 = scmp.lt.s32.totalorder %s23, 1
        %s347 = scalar_select %p346, %s23, 1
        %p348 = scmp.lt.s32.totalorder %s24, 1
        %s349 = scalar_select %p348, %s24, 1
        %s350 = smul.addr %s347, 2
        %s351 = sadd.s32 %s349, %s350
        %s352 = smul.addr %s351, 2
        %s353 = scalar_lea.vmem %s2, %s352
      $region52: #{glore_unit_v2_forward.3} parent=39 // pred_fallthru
        _
      // Predicated region
      $region53: #{glore_unit_v2_forward.3} parent=39 // pred_check
        %p354 = pneg %p130
      $region54: #{glore_unit_v2_forward.3} parent=39 // pred_check_branch
        %356 = sbr.rel (%p354) target = $region56
      $region55: #{glore_unit_v2_forward.3} parent=39 // pred_region
        %p357 = scmp.lt.s32.totalorder %s23, 1
        %s358 = scalar_select %p357, %s23, 1
        %p359 = scmp.lt.s32.totalorder %s24, 1
        %s360 = scalar_select %p359, %s24, 1
        %s361 = smul.addr %s358, 2
        %s362 = sadd.s32 %s360, %s361
        %s363 = smul.addr %s362, 4
        %s364 = scalar_lea.vmem %s3, %s363
      $region56: #{glore_unit_v2_forward.3} parent=39 // pred_fallthru
        _
    $region40: #{glore_unit_v2_forward.3} parent=5 // pred_fallthru
      _
    %p365 = scmp.le.s32.totalorder 1, %s16
    %p366 = scmp.lt.s32.totalorder %s16, 5
    %p367 = pnand %p365, %p366
    %p368 = pneg %p367
    // Predicated region
    $region57: #{glore_unit_v2_forward.3} parent=5 // pred_check
      _
    $region58: #{glore_unit_v2_forward.3} parent=5 // pred_check_branch
      %370 = sbr.rel (%p367) target = $region60
    $region59: #{glore_unit_v2_forward.3} parent=5 // pred_region
      %s371 = ssub.s32 %s16, 1
      %p372 = scmp.lt.s32.totalorder %s25, 1
      %s373 = scalar_select %p372, %s25, 1
      %s374 = smul.addr %s373, 2
      %s375 = smul.addr %s374, 4
      %s376 = scalar_lea.vmem %s0, %s375
      %p377 = pneg %p54
      %p378 = pneg %p51
      %p379 = scmp.lt.s32.totalorder %s25, 1
      %s380 = scalar_select %p379, %s25, 1
      %s381 = smul.addr %s380, 2
      %s382 = smul.addr %s381, 2
      %s383 = scalar_lea.vmem %s1, %s382
      %p384 = pneg %p80
      %p385 = pneg %p77
      %p386 = scmp.lt.s32.totalorder %s25, 1
      %s387 = scalar_select %p386, %s25, 1
      %p388 = scmp.lt.s32.totalorder %s26, 1
      %s389 = scalar_select %p388, %s26, 1
      %s390 = smul.addr %s387, 2
      %s391 = sadd.s32 %s389, %s390
      %s392 = smul.addr %s391, 2
      %s393 = scalar_lea.vmem %s2, %s392
      %p394 = pneg %p108
      %p395 = pneg %p105
      %p396 = scmp.lt.s32.totalorder %s25, 1
      %s397 = scalar_select %p396, %s25, 1
      %p398 = scmp.lt.s32.totalorder %s26, 1
      %s399 = scalar_select %p398, %s26, 1
      %s400 = smul.addr %s397, 2
      %s401 = sadd.s32 %s399, %s400
      %s402 = smul.addr %s401, 4
      %s403 = scalar_lea.vmem %s3, %s402
      %p404 = pneg %p136
      %p405 = pneg %p133
      %p406 = pneg %p157
      %p407 = pneg %p154
      %p408 = pneg %p178
      %p409 = pneg %p175
      %p410 = pneg %p199
      %p411 = pneg %p196
      %p412 = pneg %p220
      %p413 = pneg %p217
      %p414 = pneg %p241
      %p415 = pneg %p238
      %p416 = pneg %p262
      %p417 = pneg %p259
      %p418 = pneg %p290
      %p419 = pneg %p287
      %p420 = scmp.lt.s32.totalorder %s25, 1
      %s421 = scalar_select %p420, %s25, 1
      %p422 = scmp.lt.s32.totalorder %s26, 1
      %s423 = scalar_select %p422, %s26, 1
      %s424 = smul.addr %s421, 2
      %s425 = sadd.s32 %s423, %s424
      %s426 = smul.addr %s425, 4
      %s427 = scalar_lea.vmem %s10, %s426
      %p428 = scmp.lt.s32.totalorder %s25, 1
      %s429 = scalar_select %p428, %s25, 1
      %s430 = smul.addr %s429, 2
      %s431 = smul.addr %s430, 4
      %s432 = scalar_lea.vmem %s0, %s431
      %p433 = scmp.lt.s32.totalorder %s25, 1
      %s434 = scalar_select %p433, %s25, 1
      %s435 = smul.addr %s434, 2
      %s436 = smul.addr %s435, 2
      %s437 = scalar_lea.vmem %s1, %s436
      %p438 = scmp.lt.s32.totalorder %s25, 1
      %s439 = scalar_select %p438, %s25, 1
      %p440 = scmp.lt.s32.totalorder %s26, 1
      %s441 = scalar_select %p440, %s26, 1
      %s442 = smul.addr %s439, 2
      %s443 = sadd.s32 %s441, %s442
      %s444 = smul.addr %s443, 2
      %s445 = scalar_lea.vmem %s2, %s444
      %p446 = scmp.lt.s32.totalorder %s25, 1
      %s447 = scalar_select %p446, %s25, 1
      %p448 = scmp.lt.s32.totalorder %s26, 1
      %s449 = scalar_select %p448, %s26, 1
      %s450 = smul.addr %s447, 2
      %s451 = sadd.s32 %s449, %s450
      %s452 = smul.addr %s451, 4
      %s453 = scalar_lea.vmem %s3, %s452
      %p454 = scmp.lt.s32.totalorder %s25, 1
      %s455 = scalar_select %p454, %s25, 1
      %p456 = scmp.lt.s32.totalorder %s26, 1
      %s457 = scalar_select %p456, %s26, 1
      %s458 = smul.addr %s455, 2
      %s459 = sadd.s32 %s457, %s458
      %s460 = smul.addr %s459, 4
      %s461 = scalar_lea.vmem %s10, %s460
      %p463 = scmp.eq.s32.totalorder %s26, 0
      // Predicated region
      $region61: #{glore_unit_v2_forward.3} parent=59 // pred_check
        %p464 = pneg %p463
      $region62: #{glore_unit_v2_forward.3} parent=59 // pred_check_branch
        %466 = sbr.rel (%p464) target = $region64
      $region63: #{glore_unit_v2_forward.3} parent=59 // pred_region
        %v467 = vld [vmem:[%s432] sm:$0xff]
        %v468 = vld [vmem:[%s437] sm:$0xf]
        %v470 = vunpack.c.l.b16 %v467
        %v471 = vunpack.c.h.b16 %v467
        %v472 = vpack.c.b16 %v470, %v470
        %v473 = vpack.c.b16 %v471, %v471
        %v478 = vunpack.c.l.s4 1983009808
        %v479 = vunpack.c.0.s8 %v478
        %v480 = vlaneseq
        %v481 = vshrl.u32 %v480, 7
        %v482 = vsub.s32 %v479, %v481
        %v483 = vrot.slane %v468, %v482
        %v484 = vcombine.high %v483, %v483
        %487 = vmatprep.subr.bf16.mxu0 %v484
        %488 = vmatpush1.bf16.xpose.msra.mxu0 %v483
        %489 = vmatprep.subr.bf16.mxu0 0
        %490 = vmatpush1.bf16.xpose.msra.mxu0 0
        %491 = vmatprep.subr.bf16.mxu0 0
        %492 = vmatpush1.bf16.xpose.msra.mxu0 0
        %493 = vmatprep.subr.bf16.mxu0 0
        %494 = vmatpush1.bf16.xpose.msra.mxu0 0
        %495 = vmatprep.subr.bf16.mxu0 0
        %496 = vmatpush1.bf16.xpose.msra.mxu0 0
        %497 = vmatprep.subr.bf16.mxu0 0
        %498 = vmatpush1.bf16.xpose.msra.mxu0 0
        %499 = vmatprep.subr.bf16.mxu0 0
        %500 = vmatpush1.bf16.xpose.msra.mxu0 0
        %501 = vmatprep.subr.bf16.mxu0 0
        %502 = vmatpush1.bf16.xpose.msra.mxu0 0
        %503 = vmatprep.subr.bf16.mxu0 0
        %504 = vmatpush1.bf16.xpose.msra.mxu0 0
        %505 = vmatprep.subr.bf16.mxu0 0
        %506 = vmatpush1.bf16.xpose.msra.mxu0 0
        %507 = vmatprep.subr.bf16.mxu0 0
        %508 = vmatpush1.bf16.xpose.msra.mxu0 0
        %509 = vmatprep.subr.bf16.mxu0 0
        %510 = vmatpush1.bf16.xpose.msra.mxu0 0
        %511 = vmatprep.subr.bf16.mxu0 0
        %512 = vmatpush1.bf16.xpose.msra.mxu0 0
        %513 = vmatprep.subr.bf16.mxu0 0
        %514 = vmatpush1.bf16.xpose.msra.mxu0 0
        %515 = vmatprep.subr.bf16.mxu0 0
        %516 = vmatpush1.bf16.xpose.msra.mxu0 0
        %517 = vmatprep.subr.bf16.mxu0 0
        %518 = vmatpush1.bf16.xpose.msra.mxu0 0
        %519 = vmatprep.mubr.bf16.mxu0 %v473
        %520 = vmatmul.mubr.bf16.gmra.mrb[0].mxu0 %v472
        %v521 = vpop.f32.mrb[0].mxu0
        %v522 = vadd.f32 0.0, %v521
        %v523 = vpop.f32.mrb[0].mxu0
        %v524 = vpop.f32.mrb[0].mxu0
        %v525 = vpop.f32.mrb[0].mxu0
        %526 = vdwg.mxu0
        %v527 = vld [vmem:[%s7] sm:$0xf]
        %v528 = vld [vmem:[%s8] sm:$0x1]
        %v530 = vlaneseq
        %v531 = vshrl.u32 %v530, 7
        %v532 = vsub.s32 0, %v531
        %v533 = vrot.slane %v528, %v532
        %vm535 = vcmask 31744
        %v537 = vsel %vm535, %v522, 0
        %v540 = vsel %vm535, %v527, 0
        %542 = vmatprep.subr.mxu0 0.0
        %543 = vmatpush1.xpose.msra.mxu0 %v540
        %544 = vmatprep.subr.mxu0 0.0
        %545 = vmatpush1.xpose.msra.mxu0 0.0
        %546 = vmatprep.subr.mxu0 0.0
        %547 = vmatpush1.xpose.msra.mxu0 0.0
        %548 = vmatprep.subr.mxu0 0.0
        %549 = vmatpush1.xpose.msra.mxu0 0.0
        %550 = vmatprep.subr.mxu0 0.0
        %551 = vmatpush1.xpose.msra.mxu0 0.0
        %552 = vmatprep.subr.mxu0 0.0
        %553 = vmatpush1.xpose.msra.mxu0 0.0
        %554 = vmatprep.subr.mxu0 0.0
        %555 = vmatpush1.xpose.msra.mxu0 0.0
        %556 = vmatprep.subr.mxu0 0.0
        %557 = vmatpush1.xpose.msra.mxu0 0.0
        %558 = vmatprep.subr.mxu0 0.0
        %559 = vmatpush1.xpose.msra.mxu0 0.0
        %560 = vmatprep.subr.mxu0 0.0
        %561 = vmatpush1.xpose.msra.mxu0 0.0
        %562 = vmatprep.subr.mxu0 0.0
        %563 = vmatpush1.xpose.msra.mxu0 0.0
        %564 = vmatprep.subr.mxu0 0.0
        %565 = vmatpush1.xpose.msra.mxu0 0.0
        %566 = vmatprep.subr.mxu0 0.0
        %567 = vmatpush1.xpose.msra.mxu0 0.0
        %568 = vmatprep.subr.mxu0 0.0
        %569 = vmatpush1.xpose.msra.mxu0 0.0
        %570 = vmatprep.subr.mxu0 0.0
        %571 = vmatpush1.xpose.msra.mxu0 0.0
        %572 = vmatprep.subr.mxu0 0.0
        %573 = vmatpush1.xpose.msra.mxu0 0.0
        %574 = vmatprep.subr.mxu0 0.0
        %575 = vmatpush1.xpose.msra.mxu0 0.0
        %576 = vmatprep.subr.mxu0 0.0
        %577 = vmatpush1.xpose.msra.mxu0 0.0
        %578 = vmatprep.subr.mxu0 0.0
        %579 = vmatpush1.xpose.msra.mxu0 0.0
        %580 = vmatprep.subr.mxu0 0.0
        %581 = vmatpush1.xpose.msra.mxu0 0.0
        %582 = vmatprep.subr.mxu0 0.0
        %583 = vmatpush1.xpose.msra.mxu0 0.0
        %584 = vmatprep.subr.mxu0 0.0
        %585 = vmatpush1.xpose.msra.mxu0 0.0
        %586 = vmatprep.subr.mxu0 0.0
        %587 = vmatpush1.xpose.msra.mxu0 0.0
        %588 = vmatprep.subr.mxu0 0.0
        %589 = vmatpush1.xpose.msra.mxu0 0.0
        %590 = vmatprep.subr.mxu0 0.0
        %591 = vmatpush1.xpose.msra.mxu0 0.0
        %592 = vmatprep.subr.mxu0 0.0
        %593 = vmatpush1.xpose.msra.mxu0 0.0
        %594 = vmatprep.subr.mxu0 0.0
        %595 = vmatpush1.xpose.msra.mxu0 0.0
        %596 = vmatprep.subr.mxu0 0.0
        %597 = vmatpush1.xpose.msra.mxu0 0.0
        %598 = vmatprep.subr.mxu0 0.0
        %599 = vmatpush1.xpose.msra.mxu0 0.0
        %600 = vmatprep.subr.mxu0 0.0
        %601 = vmatpush1.xpose.msra.mxu0 0.0
        %602 = vmatprep.subr.mxu0 0.0
        %603 = vmatpush1.xpose.msra.mxu0 0.0
        %604 = vmatprep.subr.mxu0 0.0
        %605 = vmatpush1.xpose.msra.mxu0 0.0
        %606 = vmatprep.mubr.f32.mxu0 0.0
        %607 = vmatmul.mubr.f32.gmra.mrb[0].mxu0 %v537
        %v608 = vpop.f32.mrb[0].mxu0
        %v609 = vadd.f32 %v533, %v608
        %v610 = vpop.f32.mrb[0].mxu0
        %611 = vdwg.mxu0
        %v612 = vadd.f32 %v609, %v522
        %v613 = vmax.f32 %v612, 0.0
        %v614 = vld [vmem:[%s9] sm:$0xff]
        %vm615 = vcmask 64512
        %v617 = vsel %vm615, %v614, 0
        %619 = vmatprep.subr.mxu0 0.0
        %620 = vmatpush1.msra.mxu0 %v613
        %621 = vmatprep.subr.mxu0 0.0
        %622 = vmatpush1.msra.mxu0 0.0
        %623 = vmatprep.subr.mxu0 0.0
        %624 = vmatpush1.msra.mxu0 0.0
        %625 = vmatprep.subr.mxu0 0.0
        %626 = vmatpush1.msra.mxu0 0.0
        %627 = vmatprep.subr.mxu0 0.0
        %628 = vmatpush1.msra.mxu0 0.0
        %629 = vmatprep.subr.mxu0 0.0
        %630 = vmatpush1.msra.mxu0 0.0
        %631 = vmatprep.subr.mxu0 0.0
        %632 = vmatpush1.msra.mxu0 0.0
        %633 = vmatprep.subr.mxu0 0.0
        %634 = vmatpush1.msra.mxu0 0.0
        %635 = vmatprep.subr.mxu0 0.0
        %636 = vmatpush1.msra.mxu0 0.0
        %637 = vmatprep.subr.mxu0 0.0
        %638 = vmatpush1.msra.mxu0 0.0
        %639 = vmatprep.subr.mxu0 0.0
        %640 = vmatpush1.msra.mxu0 0.0
        %641 = vmatprep.subr.mxu0 0.0
        %642 = vmatpush1.msra.mxu0 0.0
        %643 = vmatprep.subr.mxu0 0.0
        %644 = vmatpush1.msra.mxu0 0.0
        %645 = vmatprep.subr.mxu0 0.0
        %646 = vmatpush1.msra.mxu0 0.0
        %647 = vmatprep.subr.mxu0 0.0
        %648 = vmatpush1.msra.mxu0 0.0
        %649 = vmatprep.subr.mxu0 0.0
        %650 = vmatpush1.msra.mxu0 0.0
        %651 = vmatprep.subr.mxu0 0.0
        %652 = vmatpush1.msra.mxu0 0.0
        %653 = vmatprep.subr.mxu0 0.0
        %654 = vmatpush1.msra.mxu0 0.0
        %655 = vmatprep.subr.mxu0 0.0
        %656 = vmatpush1.msra.mxu0 0.0
        %657 = vmatprep.subr.mxu0 0.0
        %658 = vmatpush1.msra.mxu0 0.0
        %659 = vmatprep.subr.mxu0 0.0
        %660 = vmatpush1.msra.mxu0 0.0
        %661 = vmatprep.subr.mxu0 0.0
        %662 = vmatpush1.msra.mxu0 0.0
        %663 = vmatprep.subr.mxu0 0.0
        %664 = vmatpush1.msra.mxu0 0.0
        %665 = vmatprep.subr.mxu0 0.0
        %666 = vmatpush1.msra.mxu0 0.0
        %667 = vmatprep.subr.mxu0 0.0
        %668 = vmatpush1.msra.mxu0 0.0
        %669 = vmatprep.subr.mxu0 0.0
        %670 = vmatpush1.msra.mxu0 0.0
        %671 = vmatprep.subr.mxu0 0.0
        %672 = vmatpush1.msra.mxu0 0.0
        %673 = vmatprep.subr.mxu0 0.0
        %674 = vmatpush1.msra.mxu0 0.0
        %675 = vmatprep.subr.mxu0 0.0
        %676 = vmatpush1.msra.mxu0 0.0
        %677 = vmatprep.subr.mxu0 0.0
        %678 = vmatpush1.msra.mxu0 0.0
        %679 = vmatprep.subr.mxu0 0.0
        %680 = vmatpush1.msra.mxu0 0.0
        %681 = vmatprep.subr.mxu0 0.0
        %682 = vmatpush1.msra.mxu0 0.0
        %683 = vmatprep.mubr.f32.mxu0 0.0
        %684 = vmatmul.mubr.f32.gmra.mrb[0].mxu0 %v617
        %v685 = vpop.f32.mrb[0].mxu0
        %v686 = vadd.f32 0.0, %v685
        %v687 = vpop.f32.mrb[0].mxu0
        %688 = vdwg.mxu0
        %v689 = vld [vmem:[%s4] sm:$0xf]
        %v691 = vsel %vm615, %v689, 0
        %693 = vmatprep.subr.mxu0 0.0
        %694 = vmatpush1.msra.mxu0 %v686
        %695 = vmatprep.subr.mxu0 0.0
        %696 = vmatpush1.msra.mxu0 0.0
        %697 = vmatprep.subr.mxu0 0.0
        %698 = vmatpush1.msra.mxu0 0.0
        %699 = vmatprep.subr.mxu0 0.0
        %700 = vmatpush1.msra.mxu0 0.0
        %701 = vmatprep.subr.mxu0 0.0
        %702 = vmatpush1.msra.mxu0 0.0
        %703 = vmatprep.subr.mxu0 0.0
        %704 = vmatpush1.msra.mxu0 0.0
        %705 = vmatprep.subr.mxu0 0.0
        %706 = vmatpush1.msra.mxu0 0.0
        %707 = vmatprep.subr.mxu0 0.0
        %708 = vmatpush1.msra.mxu0 0.0
        %709 = vmatprep.subr.mxu0 0.0
        %710 = vmatpush1.msra.mxu0 0.0
        %711 = vmatprep.subr.mxu0 0.0
        %712 = vmatpush1.msra.mxu0 0.0
        %713 = vmatprep.subr.mxu0 0.0
        %714 = vmatpush1.msra.mxu0 0.0
        %715 = vmatprep.subr.mxu0 0.0
        %716 = vmatpush1.msra.mxu0 0.0
        %717 = vmatprep.subr.mxu0 0.0
        %718 = vmatpush1.msra.mxu0 0.0
        %719 = vmatprep.subr.mxu0 0.0
        %720 = vmatpush1.msra.mxu0 0.0
        %721 = vmatprep.subr.mxu0 0.0
        %722 = vmatpush1.msra.mxu0 0.0
        %723 = vmatprep.subr.mxu0 0.0
        %724 = vmatpush1.msra.mxu0 0.0
        %725 = vmatprep.subr.mxu0 0.0
        %726 = vmatpush1.msra.mxu0 0.0
        %727 = vmatprep.subr.mxu0 0.0
        %728 = vmatpush1.msra.mxu0 0.0
        %729 = vmatprep.subr.mxu0 0.0
        %730 = vmatpush1.msra.mxu0 0.0
        %731 = vmatprep.subr.mxu0 0.0
        %732 = vmatpush1.msra.mxu0 0.0
        %733 = vmatprep.subr.mxu0 0.0
        %734 = vmatpush1.msra.mxu0 0.0
        %735 = vmatprep.subr.mxu0 0.0
        %736 = vmatpush1.msra.mxu0 0.0
        %737 = vmatprep.subr.mxu0 0.0
        %738 = vmatpush1.msra.mxu0 0.0
        %739 = vmatprep.subr.mxu0 0.0
        %740 = vmatpush1.msra.mxu0 0.0
        %741 = vmatprep.subr.mxu0 0.0
        %742 = vmatpush1.msra.mxu0 0.0
        %743 = vmatprep.subr.mxu0 0.0
        %744 = vmatpush1.msra.mxu0 0.0
        %745 = vmatprep.subr.mxu0 0.0
        %746 = vmatpush1.msra.mxu0 0.0
        %747 = vmatprep.subr.mxu0 0.0
        %748 = vmatpush1.msra.mxu0 0.0
        %749 = vmatprep.subr.mxu0 0.0
        %750 = vmatpush1.msra.mxu0 0.0
        %751 = vmatprep.subr.mxu0 0.0
        %752 = vmatpush1.msra.mxu0 0.0
        %753 = vmatprep.subr.mxu0 0.0
        %754 = vmatpush1.msra.mxu0 0.0
        %755 = vmatprep.subr.mxu0 0.0
        %756 = vmatpush1.msra.mxu0 0.0
        %757 = vmatprep.mubr.f32.mxu0 0.0
        %758 = vmatmul.mubr.f32.gmra.mrb[0].mxu0 %v691
        %v759 = vpop.f32.mrb[0].mxu0
        %v760 = vadd.f32 0.0, %v759
        %v761 = vpop.f32.mrb[0].mxu0
        %762 = vdwg.mxu0
        %v763 = vld [vmem:[%s5] sm:$0xf]
        %765 = vset.pattern.permute.xlu0 0
        %766 = vperm.xlu0 %765, %v763
        %v767 = vpop.permute.xlu0 %766
        %v769 = vmul.f32 %v760, %v767
        %vm770 = vcmask 27648
        %771 = vst.msk [vmem:[#allocation2] sm:$0xf] %vm770, %v769
      $region64: #{glore_unit_v2_forward.3} parent=59 // pred_fallthru
        _
      %v772 = vld [vmem:[#allocation2] sm:$0xf]
      %v773 = vpack.c.bf16 %v772, %v772
      %v774 = vld [vmem:[%s445] sm:$0x3]
      %vm775 = vcmask 31744
      %v777 = vsel %vm775, %v773, 0
      %vm779 = vcmask 1041408
      %v781 = vsel %vm779, %v774, 0
      %783 = vmatprep.subr.bf16.mxu0 0
      %784 = vmatpush1.bf16.msra.mxu0 %v781
      %785 = vmatprep.subr.bf16.mxu0 0
      %786 = vmatpush1.bf16.msra.mxu0 0
      %787 = vmatprep.subr.bf16.mxu0 0
      %788 = vmatpush1.bf16.msra.mxu0 0
      %789 = vmatprep.subr.bf16.mxu0 0
      %790 = vmatpush1.bf16.msra.mxu0 0
      %791 = vmatprep.subr.bf16.mxu0 0
      %792 = vmatpush1.bf16.msra.mxu0 0
      %793 = vmatprep.subr.bf16.mxu0 0
      %794 = vmatpush1.bf16.msra.mxu0 0
      %795 = vmatprep.subr.bf16.mxu0 0
      %796 = vmatpush1.bf16.msra.mxu0 0
      %797 = vmatprep.subr.bf16.mxu0 0
      %798 = vmatpush1.bf16.msra.mxu0 0
      %799 = vmatprep.subr.bf16.mxu0 0
      %800 = vmatpush1.bf16.msra.mxu0 0
      %801 = vmatprep.subr.bf16.mxu0 0
      %802 = vmatpush1.bf16.msra.mxu0 0
      %803 = vmatprep.subr.bf16.mxu0 0
      %804 = vmatpush1.bf16.msra.mxu0 0
      %805 = vmatprep.subr.bf16.mxu0 0
      %806 = vmatpush1.bf16.msra.mxu0 0
      %807 = vmatprep.subr.bf16.mxu0 0
      %808 = vmatpush1.bf16.msra.mxu0 0
      %809 = vmatprep.subr.bf16.mxu0 0
      %810 = vmatpush1.bf16.msra.mxu0 0
      %811 = vmatprep.subr.bf16.mxu0 0
      %812 = vmatpush1.bf16.msra.mxu0 0
      %813 = vmatprep.subr.bf16.mxu0 0
      %814 = vmatpush1.bf16.msra.mxu0 0
      %815 = vmatprep.mubr.bf16.mxu0 0
      %816 = vmatmul.mubr.bf16.gmra.mrb[0].mxu0 %v777
      %v817 = vpop.f32.mrb[0].mxu0
      %v818 = vadd.f32 0.0, %v817
      %v819 = vpop.f32.mrb[0].mxu0
      %v820 = vpop.f32.mrb[0].mxu0
      %v821 = vpop.f32.mrb[0].mxu0
      %822 = vdwg.mxu0
      %v823 = vld [vmem:[%s453] sm:$0xf]
      %v824 = vadd.f32 %v823, %v818
      %v825 = vld [vmem:[%s6] sm:$0xf]
      %827 = vset.pattern.permute.xlu0 0
      %828 = vperm.xlu0 %827, %v825
      %v829 = vpop.permute.xlu0 %828
      %v831 = vadd.f32 %v824, %v829
      %832 = vst [vmem:[%s461] sm:$0xf] %v831
      %p833 = scmp.lt.s32.totalorder %s25, 1
      %s834 = scalar_select %p833, %s25, 1
      %p835 = scmp.lt.s32.totalorder %s26, 1
      %s836 = scalar_select %p835, %s26, 1
      %s837 = smul.addr %s834, 2
      %s838 = sadd.s32 %s836, %s837
      %s839 = smul.addr %s838, 4
      %s840 = scalar_lea.vmem %s10, %s839
      // Predicated region
      $region65: #{glore_unit_v2_forward.3} parent=59 // pred_check
        %p841 = pneg %p287
      $region66: #{glore_unit_v2_forward.3} parent=59 // pred_check_branch
        %843 = sbr.rel (%p841) target = $region68
      $region67: #{glore_unit_v2_forward.3} parent=59 // pred_region
        _
      $region68: #{glore_unit_v2_forward.3} parent=59 // pred_fallthru
        _
    $region60: #{glore_unit_v2_forward.3} parent=5 // pred_fallthru
      _
    %p844 = scmp.le.s32.totalorder 2, %s16
    // Predicated region
    $region69: #{glore_unit_v2_forward.3} parent=5 // pred_check
      %p845 = pneg %p844
    $region70: #{glore_unit_v2_forward.3} parent=5 // pred_check_branch
      %847 = sbr.rel (%p845) target = $region72
    $region71: #{glore_unit_v2_forward.3} parent=5 // pred_region
      %s848 = ssub.s32 %s16, 2
      // Predicated region
      $region73: #{glore_unit_v2_forward.3} parent=71 // pred_check
        %p849 = pneg %p293
      $region74: #{glore_unit_v2_forward.3} parent=71 // pred_check_branch
        %851 = sbr.rel (%p849) target = $region76
      $region75: #{glore_unit_v2_forward.3} parent=71 // pred_region
        %p852 = scmp.lt.s32.totalorder %s27, 1
        %s853 = scalar_select %p852, %s27, 1
        %p854 = scmp.lt.s32.totalorder %s28, 1
        %s855 = scalar_select %p854, %s28, 1
        %s856 = smul.addr %s853, 2
        %s857 = sadd.s32 %s855, %s856
        %s858 = smul.addr %s857, 4
        %s859 = scalar_lea.vmem %s10, %s858
      $region76: #{glore_unit_v2_forward.3} parent=71 // pred_fallthru
        _
    $region72: #{glore_unit_v2_forward.3} parent=5 // pred_fallthru
      _
  $region6: #{glore_unit_v2_forward.3} parent=0 // loop_footer
    %s20 = sadd.s32 1, %s16
  $region7: #{glore_unit_v2_forward.3} parent=0 // loop_footer_branch
    %15 = sbr.rel target = $region3
  $region8: #{glore_unit_v2_forward.3} parent=0 // loop_exit
    _

</llo_original>
